<compile_context>
chip_gen: v7x
topology: tpu7x:2x2x1
jax: 0.10.0
libtpu: 0.0.40
codegen_flags: <defaults>
</compile_context>

<pallas_src>
import jax
import jax.numpy as jnp
from jax.experimental import pallas as pl
from jax.experimental.pallas import tpu as pltpu

EPS = 1e-5  # F.batch_norm default eps


def _bn_fused(x, gamma, beta):
    """F.batch_norm(training=True) with fused stats: var = E[x^2] - mean^2 (f32)."""
    inv_n = 1.0 / x.shape[0]
    s1 = jnp.sum(x, axis=0, keepdims=True)
    s2 = jnp.sum(x * x, axis=0, keepdims=True)
    mean = s1 * inv_n
    var = s2 * inv_n - mean * mean
    return (x - mean) * jax.lax.rsqrt(var + EPS) * gamma + beta


def _bn_ref(x, gamma, beta):
    """Reference batch-norm (two-pass, biased variance)."""
    mean = jnp.mean(x, axis=0, keepdims=True)
    var = jnp.mean((x - mean) ** 2, axis=0, keepdims=True)
    return (x - mean) * jax.lax.rsqrt(var + EPS) * gamma + beta


def mymodel_kernel(idx_ref,                                   # scalar prefetch (SMEM): (2, E) int32
                   x_ref, a_ref,
                   w0t_ref, b0_ref, g1_ref, be1_ref,
                   w2t_ref, b2_ref, g3_ref, be3_ref,
                   w4s_ref, w4d_ref, b4_ref, g5_ref, be5_ref,
                   w6t_ref, b6_ref, g7_ref, be7_ref,
                   w8t_ref, b8_ref,
                   out_ref,
                   psrc_ref, pdst_ref, ef_ref):               # VMEM scratch
    f32 = jnp.float32
    bf16 = jnp.bfloat16

    x = x_ref[...]          # bf16 (N, In)
    a = a_ref[...]          # bf16 (N, N)  normalized adjacency

    # --- GCN layer 1: A_norm @ (X @ W0^T) + b0, then BN + ReLU --------------
    h = jnp.dot(x, w0t_ref[...], preferred_element_type=f32)                 # (N, H) f32
    h = jnp.dot(a, h.astype(bf16), preferred_element_type=f32) + b0_ref[...]
    x1 = jnp.maximum(_bn_fused(h, g1_ref[...], be1_ref[...]), 0.0)

    # --- GCN layer 2 + BN + residual ReLU -----------------------------------
    h = jnp.dot(x1.astype(bf16), w2t_ref[...], preferred_element_type=f32)
    h = jnp.dot(a, h.astype(bf16), preferred_element_type=f32) + b2_ref[...]
    h = _bn_fused(h, g3_ref[...], be3_ref[...])
    x2 = jnp.maximum(h + x1, 0.0)

    # --- project-then-gather (linearity of F.linear over cat(src, dst)) -----
    # F.linear(cat(x2[src], x2[dst]), w4) == (x2 @ w4t_src)[src] + (x2 @ w4t_dst)[dst]
    x2b = x2.astype(bf16)
    psrc_ref[...] = jnp.dot(x2b, w4s_ref[...], preferred_element_type=f32)   # (N, Eh)
    pdst_ref[...] = jnp.dot(x2b, w4d_ref[...], preferred_element_type=f32)   # (N, Eh)

    n_edges = ef_ref.shape[0]

    @pl.loop(0, n_edges)
    def _(e):
        s = idx_ref[0, e]
        d = idx_ref[1, e]
        ef_ref[pl.ds(e, 1), :] = (psrc_ref[pl.ds(s, 1), :]
                                  + pdst_ref[pl.ds(d, 1), :])

    # --- edge MLP head -------------------------------------------------------
    ef = ef_ref[...] + b4_ref[...]
    ef = jnp.maximum(_bn_fused(ef, g5_ref[...], be5_ref[...]), 0.0)

    ef = jnp.dot(ef.astype(bf16), w6t_ref[...], preferred_element_type=f32) + b6_ref[...]
    ef = jnp.maximum(_bn_fused(ef, g7_ref[...], be7_ref[...]), 0.0)

    # lane-dense output: w8t/b8 are zero-padded to a multiple of 128 lanes
    out_ref[...] = jnp.dot(ef.astype(bf16), w8t_ref[...],
                           preferred_element_type=f32) + b8_ref[...]


def init_params(key, num_inputs, num_outputs, num_hiddens, num_edg_hiddens):
    """Deterministic init matching the module's __init__ (kaiming_normal_ etc.)."""
    ks = jax.random.split(key, 5)

    def kaiming(k, shape):  # shape = [out, in]; fan_in mode, gain = sqrt(2)
        std = (2.0 / shape[1]) ** 0.5
        return std * jax.random.normal(k, shape, jnp.float32)

    H, Eh, O, In = num_hiddens, num_edg_hiddens, num_outputs, num_inputs
    z, o = jnp.zeros, jnp.ones
    w0 = kaiming(ks[0], (H, In)); b0 = z(H, jnp.float32)
    w1 = o(H, jnp.float32);       b1 = z(H, jnp.float32)
    w2 = kaiming(ks[1], (H, H));  b2 = z(H, jnp.float32)
    w3 = o(H, jnp.float32);       b3 = z(H, jnp.float32)
    w4 = kaiming(ks[2], (Eh, Eh)); b4 = z(Eh, jnp.float32)
    w5 = o(Eh, jnp.float32);       b5 = z(Eh, jnp.float32)
    w6 = kaiming(ks[3], (Eh, Eh)); b6 = z(Eh, jnp.float32)
    w7 = o(Eh, jnp.float32);       b7 = z(Eh, jnp.float32)
    w8 = kaiming(ks[4], (O, Eh));  b8 = z(O, jnp.float32)
    return (w0, b0, w1, b1, w2, b2, w3, b3, w4, b4,
            w5, b5, w6, b6, w7, b7, w8, b8)


def _gcn_norm_adj(n_nodes, edge_index):
    """Dense symmetric-normalized adjacency with added self-loops (f32)."""
    src, dst = edge_index[0], edge_index[1]
    adj = jnp.zeros((n_nodes, n_nodes), jnp.float32).at[dst, src].add(1.0)
    adj = adj.at[jnp.arange(n_nodes), jnp.arange(n_nodes)].add(1.0)
    deg = adj.sum(axis=1)
    dinv = jnp.where(deg > 0, 1.0 / jnp.sqrt(deg), 0.0)
    return dinv[:, None] * adj * dinv[None, :]


def mymodel_forward(x, edge_index, params):
    N, In = x.shape
    E = edge_index.shape[1]
    (w0, b0, w1, b1, w2, b2, w3, b3, w4, b4,
     w5, b5, w6, b6, w7, b7, w8, b8) = params
    H = w0.shape[0]
    Eh = w4.shape[0]
    O = w8.shape[0]
    Opad = max(128, ((O + 127) // 128) * 128)

    a_norm = _gcn_norm_adj(N, edge_index)

    bf = lambda t: t.astype(jnp.bfloat16)
    row = lambda v: v.reshape(1, -1).astype(jnp.float32)
    w4t = w4.T  # [2H (in), Eh (out)]

    # zero-pad the last linear to a lane-dense (>=128) output width
    w8t_pad = jnp.zeros((Eh, Opad), jnp.float32).at[:, :O].set(w8.T).astype(jnp.bfloat16)
    b8_pad = jnp.zeros((1, Opad), jnp.float32).at[:, :O].set(b8)

    tensor_inputs = (
        bf(x), bf(a_norm),
        bf(w0.T), row(b0), row(w1), row(b1),
        bf(w2.T), row(b2), row(w3), row(b3),
        bf(w4t[:H, :]), bf(w4t[H:, :]), row(b4), row(w5), row(b5),
        bf(w6.T), row(b6), row(w7), row(b7),
        w8t_pad, b8_pad,
    )

    # whole-array blocks (single grid step); index_maps also receive the
    # scalar-prefetch ref as a trailing positional arg.
    in_specs = [pl.BlockSpec(t.shape, lambda i, idx, nd=t.ndim: (0,) * nd)
                for t in tensor_inputs]
    out_spec = pl.BlockSpec((E, Opad), lambda i, idx: (0, 0))

    grid_spec = pltpu.PrefetchScalarGridSpec(
        num_scalar_prefetch=1,
        grid=(1,),
        in_specs=in_specs,
        out_specs=out_spec,
        scratch_shapes=[
            pltpu.VMEM((N, Eh), jnp.float32),   # per-node src projection
            pltpu.VMEM((N, Eh), jnp.float32),   # per-node dst projection
            pltpu.VMEM((E, Eh), jnp.float32),   # gathered edge features
        ],
    )

    flops = 2 * (N * In * H + N * N * H          # GCN1
                 + N * H * H + N * N * H         # GCN2
                 + 2 * N * H * Eh                # per-node w4 projections
                 + E * Eh * Eh                   # w6
                 + E * Eh * Opad)                # w8 (padded)
    bytes_accessed = int(sum(int(t.size) * t.dtype.itemsize for t in tensor_inputs)
                         + 2 * E * 4 + E * Opad * 4)
    transcendentals = 2 * H + 2 * Eh             # rsqrt per BN feature

    out = pl.pallas_call(
        mymodel_kernel,
        grid_spec=grid_spec,
        out_shape=jax.ShapeDtypeStruct((E, Opad), jnp.float32),
        compiler_params=pltpu.CompilerParams(
            dimension_semantics=("arbitrary",),
            vmem_limit_bytes=32 * 1024 * 1024),
        cost_estimate=pl.CostEstimate(flops=flops,
                                      transcendentals=transcendentals,
                                      bytes_accessed=bytes_accessed),
    )(edge_index.astype(jnp.int32), *tensor_inputs)

    return out[:, :O]


def mymodel_reference(x, edge_index, params):
    """Pure-JAX reference (same assumed GCN semantics, matched bf16 matmul
    precision) using the original gather-then-project / concat formulation."""
    f32 = jnp.float32
    bf = lambda t: t.astype(jnp.bfloat16)
    mm = lambda p, q: jnp.dot(bf(p), bf(q), preferred_element_type=f32)

    a_norm = _gcn_norm_adj(x.shape[0], edge_index)
    (w0, b0, w1, b1, w2, b2, w3, b3, w4, b4,
     w5, b5, w6, b6, w7, b7, w8, b8) = params

    h = mm(a_norm, mm(x, w0.T)) + b0
    x1 = jax.nn.relu(_bn_ref(h, w1, b1))
    h = mm(a_norm, mm(x1, w2.T)) + b2
    x2 = jax.nn.relu(_bn_ref(h, w3, b3) + x1)

    ef = jnp.concatenate([x2[edge_index[0]], x2[edge_index[1]]], axis=1)
    ef = mm(ef, w4.T) + b4
    ef = jax.nn.relu(_bn_ref(ef, w5, b5))
    ef = mm(ef, w6.T) + b6
    ef = jax.nn.relu(_bn_ref(ef, w7, b7))
    return mm(ef, w8.T) + b8


if __name__ == "__main__":
    # Small shapes implied by the forward: node graph + edge MLP head.
    N_NODES = 8
    N_EDGES = 16
    NUM_INPUTS = 16
    NUM_HIDDENS = 32
    NUM_EDG_HIDDENS = 2 * NUM_HIDDENS  # required by forward's shape algebra
    NUM_OUTPUTS = 4

    key = jax.random.PRNGKey(0)
    kx, ks, kd, kp = jax.random.split(key, 4)
    x = jax.random.normal(kx, (N_NODES, NUM_INPUTS), jnp.float32)
    edge_index = jnp.stack([
        jax.random.randint(ks, (N_EDGES,), 0, N_NODES),
        jax.random.randint(kd, (N_EDGES,), 0, N_NODES),
    ]).astype(jnp.int32)

    params = init_params(kp, NUM_INPUTS, NUM_OUTPUTS, NUM_HIDDENS, NUM_EDG_HIDDENS)

    rel_pre = mymodel_forward(x, edge_index, params)
    rel_pre = jax.block_until_ready(rel_pre)

    ref = mymodel_reference(x, edge_index, params)
    assert rel_pre.shape == (N_EDGES, NUM_OUTPUTS)
    assert jnp.allclose(rel_pre, ref, rtol=1e-2, atol=1e-2)

    print("KERNEL_OK")
</pallas_src>

<mosaic_0001>
module attributes {stable_mosaic.version = 11 : i64} {
  func.func @mymodel_kernel(%arg0: i32, %arg1: memref<2x16xi32, #tpu.memory_space<smem>>, %arg2: memref<8x16xbf16, #tpu.memory_space<vmem>>, %arg3: memref<8x8xbf16, #tpu.memory_space<vmem>>, %arg4: memref<16x32xbf16, #tpu.memory_space<vmem>>, %arg5: memref<1x32xf32, #tpu.memory_space<vmem>>, %arg6: memref<1x32xf32, #tpu.memory_space<vmem>>, %arg7: memref<1x32xf32, #tpu.memory_space<vmem>>, %arg8: memref<32x32xbf16, #tpu.memory_space<vmem>>, %arg9: memref<1x32xf32, #tpu.memory_space<vmem>>, %arg10: memref<1x32xf32, #tpu.memory_space<vmem>>, %arg11: memref<1x32xf32, #tpu.memory_space<vmem>>, %arg12: memref<32x64xbf16, #tpu.memory_space<vmem>>, %arg13: memref<32x64xbf16, #tpu.memory_space<vmem>>, %arg14: memref<1x64xf32, #tpu.memory_space<vmem>>, %arg15: memref<1x64xf32, #tpu.memory_space<vmem>>, %arg16: memref<1x64xf32, #tpu.memory_space<vmem>>, %arg17: memref<64x64xbf16, #tpu.memory_space<vmem>>, %arg18: memref<1x64xf32, #tpu.memory_space<vmem>>, %arg19: memref<1x64xf32, #tpu.memory_space<vmem>>, %arg20: memref<1x64xf32, #tpu.memory_space<vmem>>, %arg21: memref<64x128xbf16, #tpu.memory_space<vmem>>, %arg22: memref<1x128xf32, #tpu.memory_space<vmem>>, %arg23: memref<16x128xf32, #tpu.memory_space<vmem>>, %arg24: memref<8x64xf32, #tpu.memory_space<vmem>>, %arg25: memref<8x64xf32, #tpu.memory_space<vmem>>, %arg26: memref<16x64xf32, #tpu.memory_space<vmem>>) attributes {dimension_semantics = [#tpu.dimension_semantics<arbitrary>], iteration_bounds = array<i64: 1>, scalar_prefetch = 1 : i64, scratch_operands = 3 : i64, tpu.core_type = #tpu.core_type<tc>, window_params = [{pipeline_mode = #tpu.pipeline_mode<synchronous>, transform_indices = @transform_0, window_bounds = array<i64: 8, 16>}, {pipeline_mode = #tpu.pipeline_mode<synchronous>, transform_indices = @transform_1, window_bounds = array<i64: 8, 8>}, {pipeline_mode = #tpu.pipeline_mode<synchronous>, transform_indices = @transform_2, window_bounds = array<i64: 16, 32>}, {pipeline_mode = #tpu.pipeline_mode<synchronous>, transform_indices = @transform_3, window_bounds = array<i64: 1, 32>}, {pipeline_mode = #tpu.pipeline_mode<synchronous>, transform_indices = @transform_4, window_bounds = array<i64: 1, 32>}, {pipeline_mode = #tpu.pipeline_mode<synchronous>, transform_indices = @transform_5, window_bounds = array<i64: 1, 32>}, {pipeline_mode = #tpu.pipeline_mode<synchronous>, transform_indices = @transform_6, window_bounds = array<i64: 32, 32>}, {pipeline_mode = #tpu.pipeline_mode<synchronous>, transform_indices = @transform_7, window_bounds = array<i64: 1, 32>}, {pipeline_mode = #tpu.pipeline_mode<synchronous>, transform_indices = @transform_8, window_bounds = array<i64: 1, 32>}, {pipeline_mode = #tpu.pipeline_mode<synchronous>, transform_indices = @transform_9, window_bounds = array<i64: 1, 32>}, {pipeline_mode = #tpu.pipeline_mode<synchronous>, transform_indices = @transform_10, window_bounds = array<i64: 32, 64>}, {pipeline_mode = #tpu.pipeline_mode<synchronous>, transform_indices = @transform_11, window_bounds = array<i64: 32, 64>}, {pipeline_mode = #tpu.pipeline_mode<synchronous>, transform_indices = @transform_12, window_bounds = array<i64: 1, 64>}, {pipeline_mode = #tpu.pipeline_mode<synchronous>, transform_indices = @transform_13, window_bounds = array<i64: 1, 64>}, {pipeline_mode = #tpu.pipeline_mode<synchronous>, transform_indices = @transform_14, window_bounds = array<i64: 1, 64>}, {pipeline_mode = #tpu.pipeline_mode<synchronous>, transform_indices = @transform_15, window_bounds = array<i64: 64, 64>}, {pipeline_mode = #tpu.pipeline_mode<synchronous>, transform_indices = @transform_16, window_bounds = array<i64: 1, 64>}, {pipeline_mode = #tpu.pipeline_mode<synchronous>, transform_indices = @transform_17, window_bounds = array<i64: 1, 64>}, {pipeline_mode = #tpu.pipeline_mode<synchronous>, transform_indices = @transform_18, window_bounds = array<i64: 1, 64>}, {pipeline_mode = #tpu.pipeline_mode<synchronous>, transform_indices = @transform_19, window_bounds = array<i64: 64, 128>}, {pipeline_mode = #tpu.pipeline_mode<synchronous>, transform_indices = @transform_20, window_bounds = array<i64: 1, 128>}, {pipeline_mode = #tpu.pipeline_mode<synchronous>, transform_indices = @transform_21, window_bounds = array<i64: 16, 128>}]} {
    %c0 = arith.constant 0 : index
    %c0_0 = arith.constant 0 : index
    %0 = vector.load %arg2[%c0, %c0_0] : memref<8x16xbf16, #tpu.memory_space<vmem>>, vector<8x16xbf16>
    %c0_1 = arith.constant 0 : index
    %c0_2 = arith.constant 0 : index
    %1 = vector.load %arg3[%c0_1, %c0_2] : memref<8x8xbf16, #tpu.memory_space<vmem>>, vector<8x8xbf16>
    %c0_3 = arith.constant 0 : index
    %c0_4 = arith.constant 0 : index
    %2 = vector.load %arg4[%c0_3, %c0_4] : memref<16x32xbf16, #tpu.memory_space<vmem>>, vector<16x32xbf16>
    %cst = arith.constant dense<0.000000e+00> : vector<8x32xf32>
    %3 = tpu.matmul %0, %2, %cst {dimension_numbers = #tpu.dot_dimension_numbers<[1], [0], [0], [1], [0, 0, 1, 1], [], []>} : vector<8x16xbf16>, vector<16x32xbf16>, vector<8x32xf32> -> vector<8x32xf32>
    %4 = arith.truncf %3 : vector<8x32xf32> to vector<8x32xbf16>
    %cst_5 = arith.constant dense<0.000000e+00> : vector<8x32xf32>
    %5 = tpu.matmul %1, %4, %cst_5 {dimension_numbers = #tpu.dot_dimension_numbers<[1], [0], [0], [1], [0, 0, 1, 1], [], []>} : vector<8x8xbf16>, vector<8x32xbf16>, vector<8x32xf32> -> vector<8x32xf32>
    %c0_6 = arith.constant 0 : index
    %c0_7 = arith.constant 0 : index
    %6 = vector.load %arg5[%c0_6, %c0_7] : memref<1x32xf32, #tpu.memory_space<vmem>>, vector<1x32xf32>
    %7 = vector.broadcast %6 : vector<1x32xf32> to vector<8x32xf32>
    %8 = arith.addf %5, %7 : vector<8x32xf32>
    %c0_8 = arith.constant 0 : index
    %c0_9 = arith.constant 0 : index
    %9 = vector.load %arg6[%c0_8, %c0_9] : memref<1x32xf32, #tpu.memory_space<vmem>>, vector<1x32xf32>
    %c0_10 = arith.constant 0 : index
    %c0_11 = arith.constant 0 : index
    %10 = vector.load %arg7[%c0_10, %c0_11] : memref<1x32xf32, #tpu.memory_space<vmem>>, vector<1x32xf32>
    %cst_12 = arith.constant dense<0.000000e+00> : vector<32xf32>
    %11 = vector.multi_reduction <add>, %8, %cst_12 [0] : vector<8x32xf32> to vector<32xf32>
    %12 = vector.shape_cast %11 : vector<32xf32> to vector<1x32xf32>
    %13 = arith.mulf %8, %8 : vector<8x32xf32>
    %cst_13 = arith.constant dense<0.000000e+00> : vector<32xf32>
    %14 = vector.multi_reduction <add>, %13, %cst_13 [0] : vector<8x32xf32> to vector<32xf32>
    %15 = vector.shape_cast %14 : vector<32xf32> to vector<1x32xf32>
    %cst_14 = arith.constant 1.250000e-01 : f32
    %16 = vector.broadcast %cst_14 : f32 to vector<1x32xf32>
    %17 = arith.mulf %12, %16 : vector<1x32xf32>
    %cst_15 = arith.constant 1.250000e-01 : f32
    %18 = vector.broadcast %cst_15 : f32 to vector<1x32xf32>
    %19 = arith.mulf %15, %18 : vector<1x32xf32>
    %20 = arith.mulf %17, %17 : vector<1x32xf32>
    %21 = arith.subf %19, %20 : vector<1x32xf32>
    %22 = vector.broadcast %17 : vector<1x32xf32> to vector<8x32xf32>
    %23 = arith.subf %8, %22 : vector<8x32xf32>
    %cst_16 = arith.constant 9.99999974E-6 : f32
    %24 = vector.broadcast %cst_16 : f32 to vector<1x32xf32>
    %25 = arith.addf %21, %24 : vector<1x32xf32>
    %26 = math.rsqrt %25 : vector<1x32xf32>
    %27 = vector.broadcast %26 : vector<1x32xf32> to vector<8x32xf32>
    %28 = arith.mulf %23, %27 : vector<8x32xf32>
    %29 = vector.broadcast %9 : vector<1x32xf32> to vector<8x32xf32>
    %30 = arith.mulf %28, %29 : vector<8x32xf32>
    %31 = vector.broadcast %10 : vector<1x32xf32> to vector<8x32xf32>
    %32 = arith.addf %30, %31 : vector<8x32xf32>
    %cst_17 = arith.constant 0.000000e+00 : f32
    %33 = vector.broadcast %cst_17 : f32 to vector<8x32xf32>
    %34 = arith.maximumf %32, %33 : vector<8x32xf32>
    %35 = arith.truncf %34 : vector<8x32xf32> to vector<8x32xbf16>
    %c0_18 = arith.constant 0 : index
    %c0_19 = arith.constant 0 : index
    %36 = vector.load %arg8[%c0_18, %c0_19] : memref<32x32xbf16, #tpu.memory_space<vmem>>, vector<32x32xbf16>
    %cst_20 = arith.constant dense<0.000000e+00> : vector<8x32xf32>
    %37 = tpu.matmul %35, %36, %cst_20 {dimension_numbers = #tpu.dot_dimension_numbers<[1], [0], [0], [1], [0, 0, 1, 1], [], []>} : vector<8x32xbf16>, vector<32x32xbf16>, vector<8x32xf32> -> vector<8x32xf32>
    %38 = arith.truncf %37 : vector<8x32xf32> to vector<8x32xbf16>
    %cst_21 = arith.constant dense<0.000000e+00> : vector<8x32xf32>
    %39 = tpu.matmul %1, %38, %cst_21 {dimension_numbers = #tpu.dot_dimension_numbers<[1], [0], [0], [1], [0, 0, 1, 1], [], []>} : vector<8x8xbf16>, vector<8x32xbf16>, vector<8x32xf32> -> vector<8x32xf32>
    %c0_22 = arith.constant 0 : index
    %c0_23 = arith.constant 0 : index
    %40 = vector.load %arg9[%c0_22, %c0_23] : memref<1x32xf32, #tpu.memory_space<vmem>>, vector<1x32xf32>
    %41 = vector.broadcast %40 : vector<1x32xf32> to vector<8x32xf32>
    %42 = arith.addf %39, %41 : vector<8x32xf32>
    %c0_24 = arith.constant 0 : index
    %c0_25 = arith.constant 0 : index
    %43 = vector.load %arg10[%c0_24, %c0_25] : memref<1x32xf32, #tpu.memory_space<vmem>>, vector<1x32xf32>
    %c0_26 = arith.constant 0 : index
    %c0_27 = arith.constant 0 : index
    %44 = vector.load %arg11[%c0_26, %c0_27] : memref<1x32xf32, #tpu.memory_space<vmem>>, vector<1x32xf32>
    %cst_28 = arith.constant dense<0.000000e+00> : vector<32xf32>
    %45 = vector.multi_reduction <add>, %42, %cst_28 [0] : vector<8x32xf32> to vector<32xf32>
    %46 = vector.shape_cast %45 : vector<32xf32> to vector<1x32xf32>
    %47 = arith.mulf %42, %42 : vector<8x32xf32>
    %cst_29 = arith.constant dense<0.000000e+00> : vector<32xf32>
    %48 = vector.multi_reduction <add>, %47, %cst_29 [0] : vector<8x32xf32> to vector<32xf32>
    %49 = vector.shape_cast %48 : vector<32xf32> to vector<1x32xf32>
    %cst_30 = arith.constant 1.250000e-01 : f32
    %50 = vector.broadcast %cst_30 : f32 to vector<1x32xf32>
    %51 = arith.mulf %46, %50 : vector<1x32xf32>
    %cst_31 = arith.constant 1.250000e-01 : f32
    %52 = vector.broadcast %cst_31 : f32 to vector<1x32xf32>
    %53 = arith.mulf %49, %52 : vector<1x32xf32>
    %54 = arith.mulf %51, %51 : vector<1x32xf32>
    %55 = arith.subf %53, %54 : vector<1x32xf32>
    %56 = vector.broadcast %51 : vector<1x32xf32> to vector<8x32xf32>
    %57 = arith.subf %42, %56 : vector<8x32xf32>
    %cst_32 = arith.constant 9.99999974E-6 : f32
    %58 = vector.broadcast %cst_32 : f32 to vector<1x32xf32>
    %59 = arith.addf %55, %58 : vector<1x32xf32>
    %60 = math.rsqrt %59 : vector<1x32xf32>
    %61 = vector.broadcast %60 : vector<1x32xf32> to vector<8x32xf32>
    %62 = arith.mulf %57, %61 : vector<8x32xf32>
    %63 = vector.broadcast %43 : vector<1x32xf32> to vector<8x32xf32>
    %64 = arith.mulf %62, %63 : vector<8x32xf32>
    %65 = vector.broadcast %44 : vector<1x32xf32> to vector<8x32xf32>
    %66 = arith.addf %64, %65 : vector<8x32xf32>
    %67 = arith.addf %66, %34 : vector<8x32xf32>
    %cst_33 = arith.constant 0.000000e+00 : f32
    %68 = vector.broadcast %cst_33 : f32 to vector<8x32xf32>
    %69 = arith.maximumf %67, %68 : vector<8x32xf32>
    %70 = arith.truncf %69 : vector<8x32xf32> to vector<8x32xbf16>
    %c0_34 = arith.constant 0 : index
    %c0_35 = arith.constant 0 : index
    %71 = vector.load %arg12[%c0_34, %c0_35] : memref<32x64xbf16, #tpu.memory_space<vmem>>, vector<32x64xbf16>
    %cst_36 = arith.constant dense<0.000000e+00> : vector<8x64xf32>
    %72 = tpu.matmul %70, %71, %cst_36 {dimension_numbers = #tpu.dot_dimension_numbers<[1], [0], [0], [1], [0, 0, 1, 1], [], []>} : vector<8x32xbf16>, vector<32x64xbf16>, vector<8x64xf32> -> vector<8x64xf32>
    %c0_37 = arith.constant 0 : index
    %c0_38 = arith.constant 0 : index
    %73 = vector.load %arg24[%c0_37, %c0_38] : memref<8x64xf32, #tpu.memory_space<vmem>>, vector<8x64xf32>
    tpu.vector_store %arg24[%c0_37, %c0_38], %72 {strides = array<i32>} : memref<8x64xf32, #tpu.memory_space<vmem>>, vector<8x64xf32>,
    %c0_39 = arith.constant 0 : index
    %c0_40 = arith.constant 0 : index
    %74 = vector.load %arg13[%c0_39, %c0_40] : memref<32x64xbf16, #tpu.memory_space<vmem>>, vector<32x64xbf16>
    %cst_41 = arith.constant dense<0.000000e+00> : vector<8x64xf32>
    %75 = tpu.matmul %70, %74, %cst_41 {dimension_numbers = #tpu.dot_dimension_numbers<[1], [0], [0], [1], [0, 0, 1, 1], [], []>} : vector<8x32xbf16>, vector<32x64xbf16>, vector<8x64xf32> -> vector<8x64xf32>
    %c0_42 = arith.constant 0 : index
    %c0_43 = arith.constant 0 : index
    %76 = vector.load %arg25[%c0_42, %c0_43] : memref<8x64xf32, #tpu.memory_space<vmem>>, vector<8x64xf32>
    tpu.vector_store %arg25[%c0_42, %c0_43], %75 {strides = array<i32>} : memref<8x64xf32, #tpu.memory_space<vmem>>, vector<8x64xf32>,
    %c0_i32 = arith.constant 0 : i32
    %c16_i32 = arith.constant 16 : i32
    %77 = arith.addi %c0_i32, %c16_i32 : i32
    %c1_i32 = arith.constant 1 : i32
    scf.for %arg27 = %c0_i32 to %77 step %c1_i32  : i32 {
      %c1_i32_81 = arith.constant 1 : i32
      %147 = arith.muli %arg27, %c1_i32_81 : i32
      %c0_i32_82 = arith.constant 0 : i32
      %148 = arith.addi %c0_i32_82, %147 : i32
      %c0_83 = arith.constant 0 : index
      %149 = arith.index_cast %148 : i32 to index
      %150 = memref.load %arg1[%c0_83, %149] : memref<2x16xi32, #tpu.memory_space<smem>>
      %c1 = arith.constant 1 : index
      %151 = arith.index_cast %148 : i32 to index
      %152 = memref.load %arg1[%c1, %151] : memref<2x16xi32, #tpu.memory_space<smem>>
      %153 = arith.index_cast %150 : i32 to index
      %c0_84 = arith.constant 0 : index
      %154 = vector.load %arg24[%153, %c0_84] : memref<8x64xf32, #tpu.memory_space<vmem>>, vector<1x64xf32>
      %155 = arith.index_cast %152 : i32 to index
      %c0_85 = arith.constant 0 : index
      %156 = vector.load %arg25[%155, %c0_85] : memref<8x64xf32, #tpu.memory_space<vmem>>, vector<1x64xf32>
      %157 = arith.addf %154, %156 : vector<1x64xf32>
      %158 = arith.index_cast %148 : i32 to index
      %c0_86 = arith.constant 0 : index
      %159 = vector.load %arg26[%158, %c0_86] : memref<16x64xf32, #tpu.memory_space<vmem>>, vector<1x64xf32>
      tpu.vector_store %arg26[%158, %c0_86], %157 {strides = array<i32>} : memref<16x64xf32, #tpu.memory_space<vmem>>, vector<1x64xf32>,
    }
    %c16_i32_44 = arith.constant 16 : i32
    %c0_45 = arith.constant 0 : index
    %c0_46 = arith.constant 0 : index
    %78 = vector.load %arg26[%c0_45, %c0_46] : memref<16x64xf32, #tpu.memory_space<vmem>>, vector<16x64xf32>
    %c0_47 = arith.constant 0 : index
    %c0_48 = arith.constant 0 : index
    %79 = vector.load %arg14[%c0_47, %c0_48] : memref<1x64xf32, #tpu.memory_space<vmem>>, vector<1x64xf32>
    %80 = vector.broadcast %79 : vector<1x64xf32> to vector<16x64xf32>
    %81 = arith.addf %78, %80 : vector<16x64xf32>
    %c0_49 = arith.constant 0 : index
    %c0_50 = arith.constant 0 : index
    %82 = vector.load %arg15[%c0_49, %c0_50] : memref<1x64xf32, #tpu.memory_space<vmem>>, vector<1x64xf32>
    %c0_51 = arith.constant 0 : index
    %c0_52 = arith.constant 0 : index
    %83 = vector.load %arg16[%c0_51, %c0_52] : memref<1x64xf32, #tpu.memory_space<vmem>>, vector<1x64xf32>
    %cst_53 = arith.constant dense<0.000000e+00> : vector<64xf32>
    %84 = vector.multi_reduction <add>, %81, %cst_53 [0] : vector<16x64xf32> to vector<64xf32>
    %85 = vector.shape_cast %84 : vector<64xf32> to vector<1x64xf32>
    %86 = arith.mulf %81, %81 : vector<16x64xf32>
    %cst_54 = arith.constant dense<0.000000e+00> : vector<64xf32>
    %87 = vector.multi_reduction <add>, %86, %cst_54 [0] : vector<16x64xf32> to vector<64xf32>
    %88 = vector.shape_cast %87 : vector<64xf32> to vector<1x64xf32>
    %cst_55 = arith.constant 6.250000e-02 : f32
    %89 = vector.broadcast %cst_55 : f32 to vector<1x64xf32>
    %90 = arith.mulf %85, %89 : vector<1x64xf32>
    %cst_56 = arith.constant 6.250000e-02 : f32
    %91 = vector.broadcast %cst_56 : f32 to vector<1x64xf32>
    %92 = arith.mulf %88, %91 : vector<1x64xf32>
    %93 = arith.mulf %90, %90 : vector<1x64xf32>
    %94 = arith.subf %92, %93 : vector<1x64xf32>
    %95 = vector.broadcast %90 : vector<1x64xf32> to vector<16x64xf32>
    %96 = arith.subf %81, %95 : vector<16x64xf32>
    %cst_57 = arith.constant 9.99999974E-6 : f32
    %97 = vector.broadcast %cst_57 : f32 to vector<1x64xf32>
    %98 = arith.addf %94, %97 : vector<1x64xf32>
    %99 = math.rsqrt %98 : vector<1x64xf32>
    %100 = vector.broadcast %99 : vector<1x64xf32> to vector<16x64xf32>
    %101 = arith.mulf %96, %100 : vector<16x64xf32>
    %102 = vector.broadcast %82 : vector<1x64xf32> to vector<16x64xf32>
    %103 = arith.mulf %101, %102 : vector<16x64xf32>
    %104 = vector.broadcast %83 : vector<1x64xf32> to vector<16x64xf32>
    %105 = arith.addf %103, %104 : vector<16x64xf32>
    %cst_58 = arith.constant 0.000000e+00 : f32
    %106 = vector.broadcast %cst_58 : f32 to vector<16x64xf32>
    %107 = arith.maximumf %105, %106 : vector<16x64xf32>
    %108 = arith.truncf %107 : vector<16x64xf32> to vector<16x64xbf16>
    %c0_59 = arith.constant 0 : index
    %c0_60 = arith.constant 0 : index
    %109 = vector.load %arg17[%c0_59, %c0_60] : memref<64x64xbf16, #tpu.memory_space<vmem>>, vector<64x64xbf16>
    %cst_61 = arith.constant dense<0.000000e+00> : vector<16x64xf32>
    %110 = tpu.matmul %108, %109, %cst_61 {dimension_numbers = #tpu.dot_dimension_numbers<[1], [0], [0], [1], [0, 0, 1, 1], [], []>} : vector<16x64xbf16>, vector<64x64xbf16>, vector<16x64xf32> -> vector<16x64xf32>
    %c0_62 = arith.constant 0 : index
    %c0_63 = arith.constant 0 : index
    %111 = vector.load %arg18[%c0_62, %c0_63] : memref<1x64xf32, #tpu.memory_space<vmem>>, vector<1x64xf32>
    %112 = vector.broadcast %111 : vector<1x64xf32> to vector<16x64xf32>
    %113 = arith.addf %110, %112 : vector<16x64xf32>
    %c0_64 = arith.constant 0 : index
    %c0_65 = arith.constant 0 : index
    %114 = vector.load %arg19[%c0_64, %c0_65] : memref<1x64xf32, #tpu.memory_space<vmem>>, vector<1x64xf32>
    %c0_66 = arith.constant 0 : index
    %c0_67 = arith.constant 0 : index
    %115 = vector.load %arg20[%c0_66, %c0_67] : memref<1x64xf32, #tpu.memory_space<vmem>>, vector<1x64xf32>
    %cst_68 = arith.constant dense<0.000000e+00> : vector<64xf32>
    %116 = vector.multi_reduction <add>, %113, %cst_68 [0] : vector<16x64xf32> to vector<64xf32>
    %117 = vector.shape_cast %116 : vector<64xf32> to vector<1x64xf32>
    %118 = arith.mulf %113, %113 : vector<16x64xf32>
    %cst_69 = arith.constant dense<0.000000e+00> : vector<64xf32>
    %119 = vector.multi_reduction <add>, %118, %cst_69 [0] : vector<16x64xf32> to vector<64xf32>
    %120 = vector.shape_cast %119 : vector<64xf32> to vector<1x64xf32>
    %cst_70 = arith.constant 6.250000e-02 : f32
    %121 = vector.broadcast %cst_70 : f32 to vector<1x64xf32>
    %122 = arith.mulf %117, %121 : vector<1x64xf32>
    %cst_71 = arith.constant 6.250000e-02 : f32
    %123 = vector.broadcast %cst_71 : f32 to vector<1x64xf32>
    %124 = arith.mulf %120, %123 : vector<1x64xf32>
    %125 = arith.mulf %122, %122 : vector<1x64xf32>
    %126 = arith.subf %124, %125 : vector<1x64xf32>
    %127 = vector.broadcast %122 : vector<1x64xf32> to vector<16x64xf32>
    %128 = arith.subf %113, %127 : vector<16x64xf32>
    %cst_72 = arith.constant 9.99999974E-6 : f32
    %129 = vector.broadcast %cst_72 : f32 to vector<1x64xf32>
    %130 = arith.addf %126, %129 : vector<1x64xf32>
    %131 = math.rsqrt %130 : vector<1x64xf32>
    %132 = vector.broadcast %131 : vector<1x64xf32> to vector<16x64xf32>
    %133 = arith.mulf %128, %132 : vector<16x64xf32>
    %134 = vector.broadcast %114 : vector<1x64xf32> to vector<16x64xf32>
    %135 = arith.mulf %133, %134 : vector<16x64xf32>
    %136 = vector.broadcast %115 : vector<1x64xf32> to vector<16x64xf32>
    %137 = arith.addf %135, %136 : vector<16x64xf32>
    %cst_73 = arith.constant 0.000000e+00 : f32
    %138 = vector.broadcast %cst_73 : f32 to vector<16x64xf32>
    %139 = arith.maximumf %137, %138 : vector<16x64xf32>
    %140 = arith.truncf %139 : vector<16x64xf32> to vector<16x64xbf16>
    %c0_74 = arith.constant 0 : index
    %c0_75 = arith.constant 0 : index
    %141 = vector.load %arg21[%c0_74, %c0_75] : memref<64x128xbf16, #tpu.memory_space<vmem>>, vector<64x128xbf16>
    %cst_76 = arith.constant dense<0.000000e+00> : vector<16x128xf32>
    %142 = tpu.matmul %140, %141, %cst_76 {dimension_numbers = #tpu.dot_dimension_numbers<[1], [0], [0], [1], [0, 0, 1, 1], [], []>} : vector<16x64xbf16>, vector<64x128xbf16>, vector<16x128xf32> -> vector<16x128xf32>
    %c0_77 = arith.constant 0 : index
    %c0_78 = arith.constant 0 : index
    %143 = vector.load %arg22[%c0_77, %c0_78] : memref<1x128xf32, #tpu.memory_space<vmem>>, vector<1x128xf32>
    %144 = vector.broadcast %143 : vector<1x128xf32> to vector<16x128xf32>
    %145 = arith.addf %142, %144 : vector<16x128xf32>
    %c0_79 = arith.constant 0 : index
    %c0_80 = arith.constant 0 : index
    %146 = vector.load %arg23[%c0_79, %c0_80] : memref<16x128xf32, #tpu.memory_space<vmem>>, vector<16x128xf32>
    tpu.vector_store %arg23[%c0_79, %c0_80], %145 {strides = array<i32>} : memref<16x128xf32, #tpu.memory_space<vmem>>, vector<16x128xf32>,
    return
  }
  func.func @transform_0(%arg0: i32, %arg1: memref<2x16xi32, #tpu.memory_space<smem>>) -> (i32, i32) {
    %c0_i32 = arith.constant 0 : i32
    %c0_i32_0 = arith.constant 0 : i32
    %c0_i32_1 = arith.constant 0 : i32
    return %c0_i32, %c0_i32_0 : i32, i32
  }
  func.func @transform_1(%arg0: i32, %arg1: memref<2x16xi32, #tpu.memory_space<smem>>) -> (i32, i32) {
    %c0_i32 = arith.constant 0 : i32
    %c0_i32_0 = arith.constant 0 : i32
    %c0_i32_1 = arith.constant 0 : i32
    return %c0_i32, %c0_i32_0 : i32, i32
  }
  func.func @transform_2(%arg0: i32, %arg1: memref<2x16xi32, #tpu.memory_space<smem>>) -> (i32, i32) {
    %c0_i32 = arith.constant 0 : i32
    %c0_i32_0 = arith.constant 0 : i32
    %c0_i32_1 = arith.constant 0 : i32
    return %c0_i32, %c0_i32_0 : i32, i32
  }
  func.func @transform_3(%arg0: i32, %arg1: memref<2x16xi32, #tpu.memory_space<smem>>) -> (i32, i32) {
    %c0_i32 = arith.constant 0 : i32
    %c0_i32_0 = arith.constant 0 : i32
    %c0_i32_1 = arith.constant 0 : i32
    return %c0_i32, %c0_i32_0 : i32, i32
  }
  func.func @transform_4(%arg0: i32, %arg1: memref<2x16xi32, #tpu.memory_space<smem>>) -> (i32, i32) {
    %c0_i32 = arith.constant 0 : i32
    %c0_i32_0 = arith.constant 0 : i32
    %c0_i32_1 = arith.constant 0 : i32
    return %c0_i32, %c0_i32_0 : i32, i32
  }
  func.func @transform_5(%arg0: i32, %arg1: memref<2x16xi32, #tpu.memory_space<smem>>) -> (i32, i32) {
    %c0_i32 = arith.constant 0 : i32
    %c0_i32_0 = arith.constant 0 : i32
    %c0_i32_1 = arith.constant 0 : i32
    return %c0_i32, %c0_i32_0 : i32, i32
  }
  func.func @transform_6(%arg0: i32, %arg1: memref<2x16xi32, #tpu.memory_space<smem>>) -> (i32, i32) {
    %c0_i32 = arith.constant 0 : i32
    %c0_i32_0 = arith.constant 0 : i32
    %c0_i32_1 = arith.constant 0 : i32
    return %c0_i32, %c0_i32_0 : i32, i32
  }
  func.func @transform_7(%arg0: i32, %arg1: memref<2x16xi32, #tpu.memory_space<smem>>) -> (i32, i32) {
    %c0_i32 = arith.constant 0 : i32
    %c0_i32_0 = arith.constant 0 : i32
    %c0_i32_1 = arith.constant 0 : i32
    return %c0_i32, %c0_i32_0 : i32, i32
  }
  func.func @transform_8(%arg0: i32, %arg1: memref<2x16xi32, #tpu.memory_space<smem>>) -> (i32, i32) {
    %c0_i32 = arith.constant 0 : i32
    %c0_i32_0 = arith.constant 0 : i32
    %c0_i32_1 = arith.constant 0 : i32
    return %c0_i32, %c0_i32_0 : i32, i32
  }
  func.func @transform_9(%arg0: i32, %arg1: memref<2x16xi32, #tpu.memory_space<smem>>) -> (i32, i32) {
    %c0_i32 = arith.constant 0 : i32
    %c0_i32_0 = arith.constant 0 : i32
    %c0_i32_1 = arith.constant 0 : i32
    return %c0_i32, %c0_i32_0 : i32, i32
  }
  func.func @transform_10(%arg0: i32, %arg1: memref<2x16xi32, #tpu.memory_space<smem>>) -> (i32, i32) {
    %c0_i32 = arith.constant 0 : i32
    %c0_i32_0 = arith.constant 0 : i32
    %c0_i32_1 = arith.constant 0 : i32
    return %c0_i32, %c0_i32_0 : i32, i32
  }
  func.func @transform_11(%arg0: i32, %arg1: memref<2x16xi32, #tpu.memory_space<smem>>) -> (i32, i32) {
    %c0_i32 = arith.constant 0 : i32
    %c0_i32_0 = arith.constant 0 : i32
    %c0_i32_1 = arith.constant 0 : i32
    return %c0_i32, %c0_i32_0 : i32, i32
  }
  func.func @transform_12(%arg0: i32, %arg1: memref<2x16xi32, #tpu.memory_space<smem>>) -> (i32, i32) {
    %c0_i32 = arith.constant 0 : i32
    %c0_i32_0 = arith.constant 0 : i32
    %c0_i32_1 = arith.constant 0 : i32
    return %c0_i32, %c0_i32_0 : i32, i32
  }
  func.func @transform_13(%arg0: i32, %arg1: memref<2x16xi32, #tpu.memory_space<smem>>) -> (i32, i32) {
    %c0_i32 = arith.constant 0 : i32
    %c0_i32_0 = arith.constant 0 : i32
    %c0_i32_1 = arith.constant 0 : i32
    return %c0_i32, %c0_i32_0 : i32, i32
  }
  func.func @transform_14(%arg0: i32, %arg1: memref<2x16xi32, #tpu.memory_space<smem>>) -> (i32, i32) {
    %c0_i32 = arith.constant 0 : i32
    %c0_i32_0 = arith.constant 0 : i32
    %c0_i32_1 = arith.constant 0 : i32
    return %c0_i32, %c0_i32_0 : i32, i32
  }
  func.func @transform_15(%arg0: i32, %arg1: memref<2x16xi32, #tpu.memory_space<smem>>) -> (i32, i32) {
    %c0_i32 = arith.constant 0 : i32
    %c0_i32_0 = arith.constant 0 : i32
    %c0_i32_1 = arith.constant 0 : i32
    return %c0_i32, %c0_i32_0 : i32, i32
  }
  func.func @transform_16(%arg0: i32, %arg1: memref<2x16xi32, #tpu.memory_space<smem>>) -> (i32, i32) {
    %c0_i32 = arith.constant 0 : i32
    %c0_i32_0 = arith.constant 0 : i32
    %c0_i32_1 = arith.constant 0 : i32
    return %c0_i32, %c0_i32_0 : i32, i32
  }
  func.func @transform_17(%arg0: i32, %arg1: memref<2x16xi32, #tpu.memory_space<smem>>) -> (i32, i32) {
    %c0_i32 = arith.constant 0 : i32
    %c0_i32_0 = arith.constant 0 : i32
    %c0_i32_1 = arith.constant 0 : i32
    return %c0_i32, %c0_i32_0 : i32, i32
  }
  func.func @transform_18(%arg0: i32, %arg1: memref<2x16xi32, #tpu.memory_space<smem>>) -> (i32, i32) {
    %c0_i32 = arith.constant 0 : i32
    %c0_i32_0 = arith.constant 0 : i32
    %c0_i32_1 = arith.constant 0 : i32
    return %c0_i32, %c0_i32_0 : i32, i32
  }
  func.func @transform_19(%arg0: i32, %arg1: memref<2x16xi32, #tpu.memory_space<smem>>) -> (i32, i32) {
    %c0_i32 = arith.constant 0 : i32
    %c0_i32_0 = arith.constant 0 : i32
    %c0_i32_1 = arith.constant 0 : i32
    return %c0_i32, %c0_i32_0 : i32, i32
  }
  func.func @transform_20(%arg0: i32, %arg1: memref<2x16xi32, #tpu.memory_space<smem>>) -> (i32, i32) {
    %c0_i32 = arith.constant 0 : i32
    %c0_i32_0 = arith.constant 0 : i32
    %c0_i32_1 = arith.constant 0 : i32
    return %c0_i32, %c0_i32_0 : i32, i32
  }
  func.func @transform_21(%arg0: i32, %arg1: memref<2x16xi32, #tpu.memory_space<smem>>) -> (i32, i32) {
    %c0_i32 = arith.constant 0 : i32
    %c0_i32_0 = arith.constant 0 : i32
    %c0_i32_1 = arith.constant 0 : i32
    return %c0_i32, %c0_i32_0 : i32, i32
  }
}

</mosaic_0001>

<llo_original>
// kernel: tpu_custom_call.1
$region0: #{tpu_custom_call.1}
  #allocation0 [shape = 'u32[]', space=smem, size = 0x4, offset = 0x4, fixed_abs, tag = 'smem constant byte address 0x4 - core index']
  #allocation1 [shape = 'u32[144,128]{1,0:T(1,128)}', space=vmem, size = 0x12000, scoped, tag = 'internal scratch']
  #allocation2 [shape = 'f32[8,64]{1,0:T(8,128)}', space=vmem, size = 0x1000, scoped, tag = 'scratch operand']
  #allocation3 [shape = 'f32[8,64]{1,0:T(8,128)}', space=vmem, size = 0x1000, scoped, tag = 'scratch operand']
  #allocation4 [shape = 'f32[16,64]{1,0:T(8,128)}', space=vmem, size = 0x2000, scoped, tag = 'scratch operand']
  #allocation5 [shape = 's32[1]{0}', space=sflag, size = 0x4, scoped, tag = 'scoped memory for tpu_custom_call.1']
  #allocation6 [shape = 'u8[1024]{0}', space=smem, size = 0x400, scoped, tag = 'prefetched SMEM operand 0']
  %s0 = inlined_call_operand.hbm [shape: s32[2,16], index: 0, kind: input, shape index: {}]
  %s1 = inlined_call_operand.hbm [shape: bf16[8,16], index: 1, kind: input, shape index: {}]
  %s2 = inlined_call_operand.hbm [shape: bf16[8,8], index: 2, kind: input, shape index: {}]
  %s3 = inlined_call_operand.hbm [shape: bf16[16,32], index: 3, kind: input, shape index: {}]
  %s4 = inlined_call_operand.hbm [shape: f32[1,32], index: 4, kind: input, shape index: {}]
  %s5 = inlined_call_operand.hbm [shape: f32[1,32], index: 5, kind: input, shape index: {}]
  %s6 = inlined_call_operand.hbm [shape: f32[1,32], index: 6, kind: input, shape index: {}]
  %s7 = inlined_call_operand.hbm [shape: bf16[32,32], index: 7, kind: input, shape index: {}]
  %s8 = inlined_call_operand.hbm [shape: f32[1,32], index: 8, kind: input, shape index: {}]
  %s9 = inlined_call_operand.hbm [shape: f32[1,32], index: 9, kind: input, shape index: {}]
  %s10 = inlined_call_operand.hbm [shape: f32[1,32], index: 10, kind: input, shape index: {}]
  %s11 = inlined_call_operand.hbm [shape: bf16[32,64], index: 11, kind: input, shape index: {}]
  %s12 = inlined_call_operand.hbm [shape: bf16[32,64], index: 12, kind: input, shape index: {}]
  %s13 = inlined_call_operand.hbm [shape: f32[1,64], index: 13, kind: input, shape index: {}]
  %s14 = inlined_call_operand.hbm [shape: f32[1,64], index: 14, kind: input, shape index: {}]
  %s15 = inlined_call_operand.hbm [shape: f32[1,64], index: 15, kind: input, shape index: {}]
  %s16 = inlined_call_operand.vmem [shape: bf16[64,64], index: 16, kind: input, shape index: {}]
  %s17 = inlined_call_operand.hbm [shape: f32[1,64], index: 17, kind: input, shape index: {}]
  %s18 = inlined_call_operand.vmem [shape: f32[1,64], index: 18, kind: input, shape index: {}]
  %s19 = inlined_call_operand.vmem [shape: f32[1,64], index: 19, kind: input, shape index: {}]
  %s20 = inlined_call_operand.vmem [shape: bf16[64,128], index: 20, kind: input, shape index: {}]
  %s21 = inlined_call_operand.vmem [shape: f32[1,128], index: 21, kind: input, shape index: {}]
  %s22 = inlined_call_operand.hbm [shape: f32[16,128], index: 22, kind: output, shape index: {}]
  %s23 = sld [smem:[#allocation0]]
  $region165: #{tpu_custom_call.1} parent=0
    _
  %s25 = ssub.s32 1, %s23
  %s26 = scalar_select 0, %s25, %s23
  %28 = dma.hbm_to_smem %s0, 32, [#allocation6], [#allocation5]
  %29 = dma.done [#allocation5], 32
  %30 = sfence
  $region1: #{tpu_custom_call.1} parent=0
    #allocation7 [shape = 'u8[2048]{0}', space=vmem, size = 0x800, scoped, tag = 'input window, operand 1, single buffered']
    #allocation8 [shape = 's32[1]{0}', space=sflag, size = 0x4, scoped, tag = 'scoped memory for tpu_custom_call.1']
    #allocation9 [shape = 's32[1]{0}', space=sflag, size = 0x4, scoped, tag = 'scoped memory for tpu_custom_call.1']
    #allocation10 [shape = 'u8[2048]{0}', space=vmem, size = 0x800, scoped, tag = 'input window, operand 2, single buffered']
    #allocation11 [shape = 's32[1]{0}', space=sflag, size = 0x4, scoped, tag = 'scoped memory for tpu_custom_call.1']
    #allocation12 [shape = 'u8[4096]{0}', space=vmem, size = 0x1000, scoped, tag = 'input window, operand 3, single buffered']
    #allocation13 [shape = 'u8[512]{0}', space=vmem, size = 0x400, scoped, tag = 'input window, operand 4, single buffered']
    #allocation14 [shape = 's32[1]{0}', space=sflag, size = 0x4, scoped, tag = 'scoped memory for tpu_custom_call.1']
    #allocation15 [shape = 'u8[512]{0}', space=vmem, size = 0x400, scoped, tag = 'input window, operand 5, single buffered']
    #allocation16 [shape = 'u8[512]{0}', space=vmem, size = 0x400, scoped, tag = 'input window, operand 6, single buffered']
    #allocation17 [shape = 's32[1]{0}', space=sflag, size = 0x4, scoped, tag = 'scoped memory for tpu_custom_call.1']
    #allocation18 [shape = 'u8[8192]{0}', space=vmem, size = 0x2000, scoped, tag = 'input window, operand 7, single buffered']
    #allocation19 [shape = 'u8[512]{0}', space=vmem, size = 0x400, scoped, tag = 'input window, operand 8, single buffered']
    #allocation20 [shape = 's32[1]{0}', space=sflag, size = 0x4, scoped, tag = 'scoped memory for tpu_custom_call.1']
    #allocation21 [shape = 'u8[512]{0}', space=vmem, size = 0x400, scoped, tag = 'input window, operand 9, single buffered']
    #allocation22 [shape = 'u8[512]{0}', space=vmem, size = 0x400, scoped, tag = 'input window, operand 10, single buffered']
    #allocation23 [shape = 's32[1]{0}', space=sflag, size = 0x4, scoped, tag = 'scoped memory for tpu_custom_call.1']
    #allocation24 [shape = 'u8[8192]{0}', space=vmem, size = 0x2000, scoped, tag = 'input window, operand 11, single buffered']
    #allocation25 [shape = 'u8[8192]{0}', space=vmem, size = 0x2000, scoped, tag = 'input window, operand 12, single buffered']
    #allocation26 [shape = 's32[1]{0}', space=sflag, size = 0x4, scoped, tag = 'scoped memory for tpu_custom_call.1']
    #allocation27 [shape = 'u8[512]{0}', space=vmem, size = 0x400, scoped, tag = 'input window, operand 13, single buffered']
    #allocation28 [shape = 'u8[512]{0}', space=vmem, size = 0x400, scoped, tag = 'input window, operand 14, single buffered']
    #allocation29 [shape = 's32[1]{0}', space=sflag, size = 0x4, scoped, tag = 'scoped memory for tpu_custom_call.1']
    #allocation30 [shape = 'u8[512]{0}', space=vmem, size = 0x400, scoped, tag = 'input window, operand 15, single buffered']
    #allocation31 [shape = 'u8[512]{0}', space=vmem, size = 0x400, scoped, tag = 'input window, operand 17, single buffered']
    #allocation32 [shape = 's32[1]{0}', space=sflag, size = 0x4, scoped, tag = 'scoped memory for tpu_custom_call.1']
    #allocation33 [shape = 'u8[8192]{0}', space=vmem, size = 0x2000, scoped, tag = 'output window, operand 0, single buffered']
    %31 = vsyncpa [#allocation8], 0
    %32 = vsyncpa [#allocation11], 0
    %33 = vsyncpa [#allocation14], 0
    %34 = vsyncpa [#allocation17], 0
    %35 = vsyncpa [#allocation20], 0
    %36 = vsyncpa [#allocation23], 0
    %37 = vsyncpa [#allocation26], 0
    %38 = vsyncpa [#allocation29], 0
    %39 = vsyncpa [#allocation32], 0
    %40 = vsyncpa [#allocation9], 0
    // Predicated region
    $region2: #{tpu_custom_call.1} parent=1 // pred_check
      _
    $region3: #{tpu_custom_call.1} parent=1 // pred_check_branch
      %42 = sbr.rel (0) target = $region5
    $region4: #{tpu_custom_call.1} parent=1 // pred_region
      %s44 = ssub.s32 64, 64
      %45 = vsyncadd [#allocation8], %s44
      %s47 = sshll.u32 [#allocation7], 4
      %s48 = int_to_ptr.vmem [resolvable:$true] %s47
      %50 = dma.hbm_to_vmem [thread:$0]  %s1, 64, %s48, [#allocation8]
    $region5: #{tpu_custom_call.1} parent=1 // pred_fallthru
      _
    // Predicated region
    $region6: #{tpu_custom_call.1} parent=1 // pred_check
      _
    $region7: #{tpu_custom_call.1} parent=1 // pred_check_branch
      %52 = sbr.rel (0) target = $region9
    $region8: #{tpu_custom_call.1} parent=1 // pred_region
      %s54 = ssub.s32 64, 64
      %55 = vsyncadd [#allocation11], %s54
      %s57 = sshll.u32 [#allocation10], 4
      %s58 = int_to_ptr.vmem [resolvable:$true] %s57
      %60 = dma.hbm_to_vmem [thread:$0]  %s2, 64, %s58, [#allocation11]
    $region9: #{tpu_custom_call.1} parent=1 // pred_fallthru
      _
    // Predicated region
    $region10: #{tpu_custom_call.1} parent=1 // pred_check
      _
    $region11: #{tpu_custom_call.1} parent=1 // pred_check_branch
      %62 = sbr.rel (0) target = $region13
    $region12: #{tpu_custom_call.1} parent=1 // pred_region
      %s64 = ssub.s32 128, 128
      %65 = vsyncadd [#allocation11], %s64
      %s66 = sshll.u32 [#allocation12], 4
      %s67 = int_to_ptr.vmem [resolvable:$true] %s66
      %72 = dma.hbm_to_vmem [thread:$0]  %s3, 128, %s67, [#allocation11], 64, 64, 4
    $region13: #{tpu_custom_call.1} parent=1 // pred_fallthru
      _
    // Predicated region
    $region14: #{tpu_custom_call.1} parent=1 // pred_check
      _
    $region15: #{tpu_custom_call.1} parent=1 // pred_check_branch
      %74 = sbr.rel (0) target = $region17
    $region16: #{tpu_custom_call.1} parent=1 // pred_region
      %s76 = ssub.s32 16, 16
      %77 = vsyncadd [#allocation14], %s76
      %s79 = sshll.u32 [#allocation13], 4
      %s80 = int_to_ptr.vmem [resolvable:$true] %s79
      %82 = dma.hbm_to_vmem [thread:$0]  %s4, 16, %s80, [#allocation14]
    $region17: #{tpu_custom_call.1} parent=1 // pred_fallthru
      _
    // Predicated region
    $region18: #{tpu_custom_call.1} parent=1 // pred_check
      _
    $region19: #{tpu_custom_call.1} parent=1 // pred_check_branch
      %84 = sbr.rel (0) target = $region21
    $region20: #{tpu_custom_call.1} parent=1 // pred_region
      %s86 = ssub.s32 16, 16
      %87 = vsyncadd [#allocation14], %s86
      %s89 = sshll.u32 [#allocation15], 4
      %s90 = int_to_ptr.vmem [resolvable:$true] %s89
      %92 = dma.hbm_to_vmem [thread:$0]  %s5, 16, %s90, [#allocation14]
    $region21: #{tpu_custom_call.1} parent=1 // pred_fallthru
      _
    // Predicated region
    $region22: #{tpu_custom_call.1} parent=1 // pred_check
      _
    $region23: #{tpu_custom_call.1} parent=1 // pred_check_branch
      %94 = sbr.rel (0) target = $region25
    $region24: #{tpu_custom_call.1} parent=1 // pred_region
      %s96 = ssub.s32 16, 16
      %97 = vsyncadd [#allocation17], %s96
      %s99 = sshll.u32 [#allocation16], 4
      %s100 = int_to_ptr.vmem [resolvable:$true] %s99
      %102 = dma.hbm_to_vmem [thread:$0]  %s6, 16, %s100, [#allocation17]
    $region25: #{tpu_custom_call.1} parent=1 // pred_fallthru
      _
    // Predicated region
    $region26: #{tpu_custom_call.1} parent=1 // pred_check
      _
    $region27: #{tpu_custom_call.1} parent=1 // pred_check_branch
      %104 = sbr.rel (0) target = $region29
    $region28: #{tpu_custom_call.1} parent=1 // pred_region
      %s106 = ssub.s32 256, 256
      %107 = vsyncadd [#allocation17], %s106
      %s108 = sshll.u32 [#allocation18], 4
      %s109 = int_to_ptr.vmem [resolvable:$true] %s108
      %114 = dma.hbm_to_vmem [thread:$0]  %s7, 256, %s109, [#allocation17], 64, 64, 4
    $region29: #{tpu_custom_call.1} parent=1 // pred_fallthru
      _
    // Predicated region
    $region30: #{tpu_custom_call.1} parent=1 // pred_check
      _
    $region31: #{tpu_custom_call.1} parent=1 // pred_check_branch
      %116 = sbr.rel (0) target = $region33
    $region32: #{tpu_custom_call.1} parent=1 // pred_region
      %s118 = ssub.s32 16, 16
      %119 = vsyncadd [#allocation20], %s118
      %s121 = sshll.u32 [#allocation19], 4
      %s122 = int_to_ptr.vmem [resolvable:$true] %s121
      %124 = dma.hbm_to_vmem [thread:$0]  %s8, 16, %s122, [#allocation20]
    $region33: #{tpu_custom_call.1} parent=1 // pred_fallthru
      _
    // Predicated region
    $region34: #{tpu_custom_call.1} parent=1 // pred_check
      _
    $region35: #{tpu_custom_call.1} parent=1 // pred_check_branch
      %126 = sbr.rel (0) target = $region37
    $region36: #{tpu_custom_call.1} parent=1 // pred_region
      %s128 = ssub.s32 16, 16
      %129 = vsyncadd [#allocation20], %s128
      %s131 = sshll.u32 [#allocation21], 4
      %s132 = int_to_ptr.vmem [resolvable:$true] %s131
      %134 = dma.hbm_to_vmem [thread:$0]  %s9, 16, %s132, [#allocation20]
    $region37: #{tpu_custom_call.1} parent=1 // pred_fallthru
      _
    // Predicated region
    $region38: #{tpu_custom_call.1} parent=1 // pred_check
      _
    $region39: #{tpu_custom_call.1} parent=1 // pred_check_branch
      %136 = sbr.rel (0) target = $region41
    $region40: #{tpu_custom_call.1} parent=1 // pred_region
      %s138 = ssub.s32 16, 16
      %139 = vsyncadd [#allocation23], %s138
      %s141 = sshll.u32 [#allocation22], 4
      %s142 = int_to_ptr.vmem [resolvable:$true] %s141
      %144 = dma.hbm_to_vmem [thread:$0]  %s10, 16, %s142, [#allocation23]
    $region41: #{tpu_custom_call.1} parent=1 // pred_fallthru
      _
    // Predicated region
    $region42: #{tpu_custom_call.1} parent=1 // pred_check
      _
    $region43: #{tpu_custom_call.1} parent=1 // pred_check_branch
      %146 = sbr.rel (0) target = $region45
    $region44: #{tpu_custom_call.1} parent=1 // pred_region
      %s148 = ssub.s32 256, 256
      %149 = vsyncadd [#allocation23], %s148
      %s150 = sshll.u32 [#allocation24], 4
      %s151 = int_to_ptr.vmem [resolvable:$true] %s150
      %156 = dma.hbm_to_vmem [thread:$0]  %s11, 256, %s151, [#allocation23], 64, 64, 4
    $region45: #{tpu_custom_call.1} parent=1 // pred_fallthru
      _
    // Predicated region
    $region46: #{tpu_custom_call.1} parent=1 // pred_check
      _
    $region47: #{tpu_custom_call.1} parent=1 // pred_check_branch
      %158 = sbr.rel (0) target = $region49
    $region48: #{tpu_custom_call.1} parent=1 // pred_region
      %s160 = ssub.s32 256, 256
      %161 = vsyncadd [#allocation26], %s160
      %s162 = sshll.u32 [#allocation25], 4
      %s163 = int_to_ptr.vmem [resolvable:$true] %s162
      %168 = dma.hbm_to_vmem [thread:$0]  %s12, 256, %s163, [#allocation26], 64, 64, 4
    $region49: #{tpu_custom_call.1} parent=1 // pred_fallthru
      _
    // Predicated region
    $region50: #{tpu_custom_call.1} parent=1 // pred_check
      _
    $region51: #{tpu_custom_call.1} parent=1 // pred_check_branch
      %170 = sbr.rel (0) target = $region53
    $region52: #{tpu_custom_call.1} parent=1 // pred_region
      %s172 = ssub.s32 16, 16
      %173 = vsyncadd [#allocation26], %s172
      %s175 = sshll.u32 [#allocation27], 4
      %s176 = int_to_ptr.vmem [resolvable:$true] %s175
      %178 = dma.hbm_to_vmem [thread:$0]  %s13, 16, %s176, [#allocation26]
    $region53: #{tpu_custom_call.1} parent=1 // pred_fallthru
      _
    // Predicated region
    $region54: #{tpu_custom_call.1} parent=1 // pred_check
      _
    $region55: #{tpu_custom_call.1} parent=1 // pred_check_branch
      %180 = sbr.rel (0) target = $region57
    $region56: #{tpu_custom_call.1} parent=1 // pred_region
      %s182 = ssub.s32 16, 16
      %183 = vsyncadd [#allocation29], %s182
      %s185 = sshll.u32 [#allocation28], 4
      %s186 = int_to_ptr.vmem [resolvable:$true] %s185
      %188 = dma.hbm_to_vmem [thread:$0]  %s14, 16, %s186, [#allocation29]
    $region57: #{tpu_custom_call.1} parent=1 // pred_fallthru
      _
    // Predicated region
    $region58: #{tpu_custom_call.1} parent=1 // pred_check
      _
    $region59: #{tpu_custom_call.1} parent=1 // pred_check_branch
      %190 = sbr.rel (0) target = $region61
    $region60: #{tpu_custom_call.1} parent=1 // pred_region
      %s192 = ssub.s32 16, 16
      %193 = vsyncadd [#allocation29], %s192
      %s195 = sshll.u32 [#allocation30], 4
      %s196 = int_to_ptr.vmem [resolvable:$true] %s195
      %198 = dma.hbm_to_vmem [thread:$0]  %s15, 16, %s196, [#allocation29]
    $region61: #{tpu_custom_call.1} parent=1 // pred_fallthru
      _
    // Predicated region
    $region62: #{tpu_custom_call.1} parent=1 // pred_check
      _
    $region63: #{tpu_custom_call.1} parent=1 // pred_check_branch
      %200 = sbr.rel (0) target = $region65
    $region64: #{tpu_custom_call.1} parent=1 // pred_region
      _
    $region65: #{tpu_custom_call.1} parent=1 // pred_fallthru
      _
    // Predicated region
    $region66: #{tpu_custom_call.1} parent=1 // pred_check
      _
    $region67: #{tpu_custom_call.1} parent=1 // pred_check_branch
      %202 = sbr.rel (0) target = $region69
    $region68: #{tpu_custom_call.1} parent=1 // pred_region
      %s204 = ssub.s32 16, 16
      %205 = vsyncadd [#allocation32], %s204
      %s207 = sshll.u32 [#allocation31], 4
      %s208 = int_to_ptr.vmem [resolvable:$true] %s207
      %210 = dma.hbm_to_vmem [thread:$0]  %s17, 16, %s208, [#allocation32]
    $region69: #{tpu_custom_call.1} parent=1 // pred_fallthru
      _
    // Predicated region
    $region70: #{tpu_custom_call.1} parent=1 // pred_check
      _
    $region71: #{tpu_custom_call.1} parent=1 // pred_check_branch
      %212 = sbr.rel (0) target = $region73
    $region72: #{tpu_custom_call.1} parent=1 // pred_region
      _
    $region73: #{tpu_custom_call.1} parent=1 // pred_fallthru
      _
    // Predicated region
    $region74: #{tpu_custom_call.1} parent=1 // pred_check
      _
    $region75: #{tpu_custom_call.1} parent=1 // pred_check_branch
      %214 = sbr.rel (0) target = $region77
    $region76: #{tpu_custom_call.1} parent=1 // pred_region
      _
    $region77: #{tpu_custom_call.1} parent=1 // pred_fallthru
      _
    // Predicated region
    $region78: #{tpu_custom_call.1} parent=1 // pred_check
      _
    $region79: #{tpu_custom_call.1} parent=1 // pred_check_branch
      %216 = sbr.rel (0) target = $region81
    $region80: #{tpu_custom_call.1} parent=1 // pred_region
      _
    $region81: #{tpu_custom_call.1} parent=1 // pred_fallthru
      _
    // Predicated region
    $region82: #{tpu_custom_call.1} parent=1 // pred_check
      _
    $region83: #{tpu_custom_call.1} parent=1 // pred_check_branch
      %218 = sbr.rel (0) target = $region85
    $region84: #{tpu_custom_call.1} parent=1 // pred_region
      _
    $region85: #{tpu_custom_call.1} parent=1 // pred_fallthru
      _
    // Predicated region
    $region86: #{tpu_custom_call.1} parent=1 // pred_check
      _
    $region87: #{tpu_custom_call.1} parent=1 // pred_check_branch
      %220 = sbr.rel (0) target = $region89
    $region88: #{tpu_custom_call.1} parent=1 // pred_region
      %221 = dma.done [#allocation8], 64
    $region89: #{tpu_custom_call.1} parent=1 // pred_fallthru
      _
    // Predicated region
    $region90: #{tpu_custom_call.1} parent=1 // pred_check
      _
    $region91: #{tpu_custom_call.1} parent=1 // pred_check_branch
      %223 = sbr.rel (0) target = $region93
    $region92: #{tpu_custom_call.1} parent=1 // pred_region
      %224 = dma.done [#allocation11], 64
    $region93: #{tpu_custom_call.1} parent=1 // pred_fallthru
      _
    // Predicated region
    $region94: #{tpu_custom_call.1} parent=1 // pred_check
      _
    $region95: #{tpu_custom_call.1} parent=1 // pred_check_branch
      %226 = sbr.rel (0) target = $region97
    $region96: #{tpu_custom_call.1} parent=1 // pred_region
      %227 = dma.done [#allocation11], 128
    $region97: #{tpu_custom_call.1} parent=1 // pred_fallthru
      _
    // Predicated region
    $region98: #{tpu_custom_call.1} parent=1 // pred_check
      _
    $region99: #{tpu_custom_call.1} parent=1 // pred_check_branch
      %229 = sbr.rel (0) target = $region101
    $region100: #{tpu_custom_call.1} parent=1 // pred_region
      %230 = dma.done [#allocation14], 16
    $region101: #{tpu_custom_call.1} parent=1 // pred_fallthru
      _
    // Predicated region
    $region102: #{tpu_custom_call.1} parent=1 // pred_check
      _
    $region103: #{tpu_custom_call.1} parent=1 // pred_check_branch
      %232 = sbr.rel (0) target = $region105
    $region104: #{tpu_custom_call.1} parent=1 // pred_region
      %233 = dma.done [#allocation14], 16
    $region105: #{tpu_custom_call.1} parent=1 // pred_fallthru
      _
    // Predicated region
    $region106: #{tpu_custom_call.1} parent=1 // pred_check
      _
    $region107: #{tpu_custom_call.1} parent=1 // pred_check_branch
      %235 = sbr.rel (0) target = $region109
    $region108: #{tpu_custom_call.1} parent=1 // pred_region
      %236 = dma.done [#allocation17], 16
    $region109: #{tpu_custom_call.1} parent=1 // pred_fallthru
      _
    // Predicated region
    $region110: #{tpu_custom_call.1} parent=1 // pred_check
      _
    $region111: #{tpu_custom_call.1} parent=1 // pred_check_branch
      %238 = sbr.rel (0) target = $region113
    $region112: #{tpu_custom_call.1} parent=1 // pred_region
      %239 = dma.done [#allocation17], 256
    $region113: #{tpu_custom_call.1} parent=1 // pred_fallthru
      _
    // Predicated region
    $region114: #{tpu_custom_call.1} parent=1 // pred_check
      _
    $region115: #{tpu_custom_call.1} parent=1 // pred_check_branch
      %241 = sbr.rel (0) target = $region117
    $region116: #{tpu_custom_call.1} parent=1 // pred_region
      %242 = dma.done [#allocation20], 16
    $region117: #{tpu_custom_call.1} parent=1 // pred_fallthru
      _
    // Predicated region
    $region118: #{tpu_custom_call.1} parent=1 // pred_check
      _
    $region119: #{tpu_custom_call.1} parent=1 // pred_check_branch
      %244 = sbr.rel (0) target = $region121
    $region120: #{tpu_custom_call.1} parent=1 // pred_region
      %245 = dma.done [#allocation20], 16
    $region121: #{tpu_custom_call.1} parent=1 // pred_fallthru
      _
    // Predicated region
    $region122: #{tpu_custom_call.1} parent=1 // pred_check
      _
    $region123: #{tpu_custom_call.1} parent=1 // pred_check_branch
      %247 = sbr.rel (0) target = $region125
    $region124: #{tpu_custom_call.1} parent=1 // pred_region
      %248 = dma.done [#allocation23], 16
    $region125: #{tpu_custom_call.1} parent=1 // pred_fallthru
      _
    // Predicated region
    $region126: #{tpu_custom_call.1} parent=1 // pred_check
      _
    $region127: #{tpu_custom_call.1} parent=1 // pred_check_branch
      %250 = sbr.rel (0) target = $region129
    $region128: #{tpu_custom_call.1} parent=1 // pred_region
      %251 = dma.done [#allocation23], 256
    $region129: #{tpu_custom_call.1} parent=1 // pred_fallthru
      _
    // Predicated region
    $region130: #{tpu_custom_call.1} parent=1 // pred_check
      _
    $region131: #{tpu_custom_call.1} parent=1 // pred_check_branch
      %253 = sbr.rel (0) target = $region133
    $region132: #{tpu_custom_call.1} parent=1 // pred_region
      %254 = dma.done [#allocation26], 256
    $region133: #{tpu_custom_call.1} parent=1 // pred_fallthru
      _
    // Predicated region
    $region134: #{tpu_custom_call.1} parent=1 // pred_check
      _
    $region135: #{tpu_custom_call.1} parent=1 // pred_check_branch
      %256 = sbr.rel (0) target = $region137
    $region136: #{tpu_custom_call.1} parent=1 // pred_region
      %257 = dma.done [#allocation26], 16
    $region137: #{tpu_custom_call.1} parent=1 // pred_fallthru
      _
    // Predicated region
    $region138: #{tpu_custom_call.1} parent=1 // pred_check
      _
    $region139: #{tpu_custom_call.1} parent=1 // pred_check_branch
      %259 = sbr.rel (0) target = $region141
    $region140: #{tpu_custom_call.1} parent=1 // pred_region
      %260 = dma.done [#allocation29], 16
    $region141: #{tpu_custom_call.1} parent=1 // pred_fallthru
      _
    // Predicated region
    $region142: #{tpu_custom_call.1} parent=1 // pred_check
      _
    $region143: #{tpu_custom_call.1} parent=1 // pred_check_branch
      %262 = sbr.rel (0) target = $region145
    $region144: #{tpu_custom_call.1} parent=1 // pred_region
      %263 = dma.done [#allocation29], 16
    $region145: #{tpu_custom_call.1} parent=1 // pred_fallthru
      _
    // Predicated region
    $region146: #{tpu_custom_call.1} parent=1 // pred_check
      _
    $region147: #{tpu_custom_call.1} parent=1 // pred_check_branch
      %265 = sbr.rel (0) target = $region149
    $region148: #{tpu_custom_call.1} parent=1 // pred_region
      %266 = dma.done [#allocation32], 16
    $region149: #{tpu_custom_call.1} parent=1 // pred_fallthru
      _
    %v268 = vld [vmem:[#allocation7] sm:$0xf]
    %v269 = vld [vmem:[#allocation10] sm:$0xf]
    %v270 = vld [vmem:[#allocation12] sm:$0xf]
    %v271 = vld [vmem:[#allocation12 + $0x4] sm:$0xf]
    %v274 = vunpack.c.l.b16 %v270
    %v275 = vunpack.c.l.b16 %v271
    %v276 = vpack.c.b16 %v275, %v274
    %vm278 = vcmask 130048
    %v280 = vsel %vm278, %v268, 0
    %282 = vmatprep.subr.bf16.mxu0 0
    %283 = vmatpush1.bf16.msra.mxu0 %v276
    %284 = vmatprep.subr.bf16.mxu0 0
    %285 = vmatpush1.bf16.msra.mxu0 0
    %286 = vmatprep.subr.bf16.mxu0 0
    %287 = vmatpush1.bf16.msra.mxu0 0
    %288 = vmatprep.subr.bf16.mxu0 0
    %289 = vmatpush1.bf16.msra.mxu0 0
    %290 = vmatprep.subr.bf16.mxu0 0
    %291 = vmatpush1.bf16.msra.mxu0 0
    %292 = vmatprep.subr.bf16.mxu0 0
    %293 = vmatpush1.bf16.msra.mxu0 0
    %294 = vmatprep.subr.bf16.mxu0 0
    %295 = vmatpush1.bf16.msra.mxu0 0
    %296 = vmatprep.subr.bf16.mxu0 0
    %297 = vmatpush1.bf16.msra.mxu0 0
    %298 = vmatprep.subr.bf16.mxu0 0
    %299 = vmatpush1.bf16.msra.mxu0 0
    %300 = vmatprep.subr.bf16.mxu0 0
    %301 = vmatpush1.bf16.msra.mxu0 0
    %302 = vmatprep.subr.bf16.mxu0 0
    %303 = vmatpush1.bf16.msra.mxu0 0
    %304 = vmatprep.subr.bf16.mxu0 0
    %305 = vmatpush1.bf16.msra.mxu0 0
    %306 = vmatprep.subr.bf16.mxu0 0
    %307 = vmatpush1.bf16.msra.mxu0 0
    %308 = vmatprep.subr.bf16.mxu0 0
    %309 = vmatpush1.bf16.msra.mxu0 0
    %310 = vmatprep.subr.bf16.mxu0 0
    %311 = vmatpush1.bf16.msra.mxu0 0
    %312 = vmatprep.subr.bf16.mxu0 0
    %313 = vmatpush1.bf16.msra.mxu0 0
    %314 = vmatprep.mubr.bf16.mxu0 0
    %315 = vmatmul.mubr.bf16.gmra.mrb[0].mxu0 %v280
    %v316 = vpop.f32.mrb[0].mxu0
    %v317 = vadd.f32 0.0, %v316
    %v318 = vpop.f32.mrb[0].mxu0
    %v319 = vpop.f32.mrb[0].mxu0
    %v320 = vpop.f32.mrb[0].mxu0
    %321 = vdwg.mxu0
    %v322 = vpack.c.bf16 %v317, %v317
    %v323 = vld [vmem:[#allocation13] sm:$0x1]
    %v325 = vlaneseq
    %v326 = vshrl.u32 %v325, 7
    %v327 = vsub.s32 0, %v326
    %v328 = vrot.slane %v323, %v327
    %vm330 = vcmask 64512
    %v332 = vsel %vm330, %v269, 0
    %vm334 = vcmask 1043456
    %v336 = vsel %vm334, %v322, 0
    %338 = vmatprep.subr.bf16.mxu0 0
    %339 = vmatpush1.bf16.msra.mxu0 %v336
    %340 = vmatprep.subr.bf16.mxu0 0
    %341 = vmatpush1.bf16.msra.mxu0 0
    %342 = vmatprep.subr.bf16.mxu0 0
    %343 = vmatpush1.bf16.msra.mxu0 0
    %344 = vmatprep.subr.bf16.mxu0 0
    %345 = vmatpush1.bf16.msra.mxu0 0
    %346 = vmatprep.subr.bf16.mxu0 0
    %347 = vmatpush1.bf16.msra.mxu0 0
    %348 = vmatprep.subr.bf16.mxu0 0
    %349 = vmatpush1.bf16.msra.mxu0 0
    %350 = vmatprep.subr.bf16.mxu0 0
    %351 = vmatpush1.bf16.msra.mxu0 0
    %352 = vmatprep.subr.bf16.mxu0 0
    %353 = vmatpush1.bf16.msra.mxu0 0
    %354 = vmatprep.subr.bf16.mxu0 0
    %355 = vmatpush1.bf16.msra.mxu0 0
    %356 = vmatprep.subr.bf16.mxu0 0
    %357 = vmatpush1.bf16.msra.mxu0 0
    %358 = vmatprep.subr.bf16.mxu0 0
    %359 = vmatpush1.bf16.msra.mxu0 0
    %360 = vmatprep.subr.bf16.mxu0 0
    %361 = vmatpush1.bf16.msra.mxu0 0
    %362 = vmatprep.subr.bf16.mxu0 0
    %363 = vmatpush1.bf16.msra.mxu0 0
    %364 = vmatprep.subr.bf16.mxu0 0
    %365 = vmatpush1.bf16.msra.mxu0 0
    %366 = vmatprep.subr.bf16.mxu0 0
    %367 = vmatpush1.bf16.msra.mxu0 0
    %368 = vmatprep.subr.bf16.mxu0 0
    %369 = vmatpush1.bf16.msra.mxu0 0
    %370 = vmatprep.mubr.bf16.mxu0 0
    %371 = vmatmul.mubr.bf16.gmra.mrb[0].mxu0 %v332
    %v372 = vpop.f32.mrb[0].mxu0
    %v373 = vadd.f32 %v328, %v372
    %v374 = vpop.f32.mrb[0].mxu0
    %v375 = vpop.f32.mrb[0].mxu0
    %v376 = vpop.f32.mrb[0].mxu0
    %377 = vdwg.mxu0
    %v378 = vld [vmem:[#allocation15] sm:$0x1]
    %v379 = vld [vmem:[#allocation16] sm:$0x1]
    %vm380 = vcmask 261120
    %v381 = vsel %vm380, %v373, 0.0
    %v382 = vrot.slane %v381, 4
    %v383 = vadd.f32 %v381, %v382
    %v384 = vrot.slane %v383, 2
    %v385 = vadd.f32 %v383, %v384
    %v386 = vrot.slane %v385, 1
    %v387 = vadd.f32 %v385, %v386
    %v388 = vmul.f32 %v373, %v373
    %v389 = vsel %vm380, %v388, 0.0
    %v390 = vrot.slane %v389, 4
    %v391 = vadd.f32 %v389, %v390
    %v392 = vrot.slane %v391, 2
    %v393 = vadd.f32 %v391, %v392
    %v394 = vrot.slane %v393, 1
    %v395 = vadd.f32 %v393, %v394
    %v396 = vmul.f32 %v387, 0.125
    %v397 = vmul.f32 %v395, 0.125
    %v398 = vmul.f32 %v396, %v396
    %v399 = vsub.f32 %v397, %v398
    %v400 = vsub.f32 %v373, %v396
    %v401 = vadd.f32 %v399, 1e-05
    %v402 = vrsqrt.pop %v401
    %v403 = vmul.f32 %v400, %v402
    %v405 = vlaneseq
    %v406 = vshrl.u32 %v405, 7
    %v407 = vsub.s32 0, %v406
    %v408 = vrot.slane %v378, %v407
    %v410 = vmul.f32 %v403, %v408
    %v412 = vlaneseq
    %v413 = vshrl.u32 %v412, 7
    %v414 = vsub.s32 0, %v413
    %v415 = vrot.slane %v379, %v414
    %v417 = vadd.f32 %v410, %v415
    %v418 = vmax.f32 %v417, 0.0
    %v419 = vpack.c.bf16 %v418, %v418
    %v420 = vld [vmem:[#allocation18] sm:$0xf]
    %v421 = vld [vmem:[#allocation18 + $0x4] sm:$0xf]
    %v422 = vld [vmem:[#allocation18 + $0x8] sm:$0xf]
    %v423 = vld [vmem:[#allocation18 + $0xc] sm:$0xf]
    %v428 = vunpack.c.l.b16 %v420
    %v429 = vunpack.c.l.b16 %v421
    %v430 = vunpack.c.l.b16 %v422
    %v431 = vunpack.c.l.b16 %v423
    %v432 = vpack.c.b16 %v429, %v428
    %v433 = vpack.c.b16 %v431, %v430
    %v437 = vsel %vm380, %v419, 0
    %439 = vmatprep.subr.bf16.mxu0 0
    %440 = vmatpush1.bf16.msra.mxu0 %v432
    %441 = vmatprep.subr.bf16.mxu0 0
    %442 = vmatpush1.bf16.msra.mxu0 %v433
    %443 = vmatprep.subr.bf16.mxu0 0
    %444 = vmatpush1.bf16.msra.mxu0 0
    %445 = vmatprep.subr.bf16.mxu0 0
    %446 = vmatpush1.bf16.msra.mxu0 0
    %447 = vmatprep.subr.bf16.mxu0 0
    %448 = vmatpush1.bf16.msra.mxu0 0
    %449 = vmatprep.subr.bf16.mxu0 0
    %450 = vmatpush1.bf16.msra.mxu0 0
    %451 = vmatprep.subr.bf16.mxu0 0
    %452 = vmatpush1.bf16.msra.mxu0 0
    %453 = vmatprep.subr.bf16.mxu0 0
    %454 = vmatpush1.bf16.msra.mxu0 0
    %455 = vmatprep.subr.bf16.mxu0 0
    %456 = vmatpush1.bf16.msra.mxu0 0
    %457 = vmatprep.subr.bf16.mxu0 0
    %458 = vmatpush1.bf16.msra.mxu0 0
    %459 = vmatprep.subr.bf16.mxu0 0
    %460 = vmatpush1.bf16.msra.mxu0 0
    %461 = vmatprep.subr.bf16.mxu0 0
    %462 = vmatpush1.bf16.msra.mxu0 0
    %463 = vmatprep.subr.bf16.mxu0 0
    %464 = vmatpush1.bf16.msra.mxu0 0
    %465 = vmatprep.subr.bf16.mxu0 0
    %466 = vmatpush1.bf16.msra.mxu0 0
    %467 = vmatprep.subr.bf16.mxu0 0
    %468 = vmatpush1.bf16.msra.mxu0 0
    %469 = vmatprep.subr.bf16.mxu0 0
    %470 = vmatpush1.bf16.msra.mxu0 0
    %471 = vmatprep.mubr.bf16.mxu0 0
    %472 = vmatmul.mubr.bf16.gmra.mrb[0].mxu0 %v437
    %v473 = vpop.f32.mrb[0].mxu0
    %v474 = vadd.f32 0.0, %v473
    %v475 = vpop.f32.mrb[0].mxu0
    %v476 = vpop.f32.mrb[0].mxu0
    %v477 = vpop.f32.mrb[0].mxu0
    %478 = vdwg.mxu0
    %v479 = vpack.c.bf16 %v474, %v474
    %v480 = vld [vmem:[#allocation19] sm:$0x1]
    %v482 = vlaneseq
    %v483 = vshrl.u32 %v482, 7
    %v484 = vsub.s32 0, %v483
    %v485 = vrot.slane %v480, %v484
    %v488 = vsel %vm334, %v479, 0
    %490 = vmatprep.subr.bf16.mxu0 0
    %491 = vmatpush1.bf16.msra.mxu0 %v488
    %492 = vmatprep.subr.bf16.mxu0 0
    %493 = vmatpush1.bf16.msra.mxu0 0
    %494 = vmatprep.subr.bf16.mxu0 0
    %495 = vmatpush1.bf16.msra.mxu0 0
    %496 = vmatprep.subr.bf16.mxu0 0
    %497 = vmatpush1.bf16.msra.mxu0 0
    %498 = vmatprep.subr.bf16.mxu0 0
    %499 = vmatpush1.bf16.msra.mxu0 0
    %500 = vmatprep.subr.bf16.mxu0 0
    %501 = vmatpush1.bf16.msra.mxu0 0
    %502 = vmatprep.subr.bf16.mxu0 0
    %503 = vmatpush1.bf16.msra.mxu0 0
    %504 = vmatprep.subr.bf16.mxu0 0
    %505 = vmatpush1.bf16.msra.mxu0 0
    %506 = vmatprep.subr.bf16.mxu0 0
    %507 = vmatpush1.bf16.msra.mxu0 0
    %508 = vmatprep.subr.bf16.mxu0 0
    %509 = vmatpush1.bf16.msra.mxu0 0
    %510 = vmatprep.subr.bf16.mxu0 0
    %511 = vmatpush1.bf16.msra.mxu0 0
    %512 = vmatprep.subr.bf16.mxu0 0
    %513 = vmatpush1.bf16.msra.mxu0 0
    %514 = vmatprep.subr.bf16.mxu0 0
    %515 = vmatpush1.bf16.msra.mxu0 0
    %516 = vmatprep.subr.bf16.mxu0 0
    %517 = vmatpush1.bf16.msra.mxu0 0
    %518 = vmatprep.subr.bf16.mxu0 0
    %519 = vmatpush1.bf16.msra.mxu0 0
    %520 = vmatprep.subr.bf16.mxu0 0
    %521 = vmatpush1.bf16.msra.mxu0 0
    %522 = vmatprep.mubr.bf16.mxu0 0
    %523 = vmatmul.mubr.bf16.gmra.mrb[0].mxu0 %v332
    %v524 = vpop.f32.mrb[0].mxu0
    %v525 = vadd.f32 %v485, %v524
    %v526 = vpop.f32.mrb[0].mxu0
    %v527 = vpop.f32.mrb[0].mxu0
    %v528 = vpop.f32.mrb[0].mxu0
    %529 = vdwg.mxu0
    %v530 = vld [vmem:[#allocation21] sm:$0x1]
    %v531 = vld [vmem:[#allocation22] sm:$0x1]
    %v532 = vsel %vm380, %v525, 0.0
    %v533 = vrot.slane %v532, 4
    %v534 = vadd.f32 %v532, %v533
    %v535 = vrot.slane %v534, 2
    %v536 = vadd.f32 %v534, %v535
    %v537 = vrot.slane %v536, 1
    %v538 = vadd.f32 %v536, %v537
    %v539 = vmul.f32 %v525, %v525
    %v540 = vsel %vm380, %v539, 0.0
    %v541 = vrot.slane %v540, 4
    %v542 = vadd.f32 %v540, %v541
    %v543 = vrot.slane %v542, 2
    %v544 = vadd.f32 %v542, %v543
    %v545 = vrot.slane %v544, 1
    %v546 = vadd.f32 %v544, %v545
    %v547 = vmul.f32 %v538, 0.125
    %v548 = vmul.f32 %v546, 0.125
    %v549 = vmul.f32 %v547, %v547
    %v550 = vsub.f32 %v548, %v549
    %v551 = vsub.f32 %v525, %v547
    %v552 = vadd.f32 %v550, 1e-05
    %v553 = vrsqrt.pop %v552
    %v554 = vmul.f32 %v551, %v553
    %v556 = vlaneseq
    %v557 = vshrl.u32 %v556, 7
    %v558 = vsub.s32 0, %v557
    %v559 = vrot.slane %v530, %v558
    %v561 = vmul.f32 %v554, %v559
    %v563 = vlaneseq
    %v564 = vshrl.u32 %v563, 7
    %v565 = vsub.s32 0, %v564
    %v566 = vrot.slane %v531, %v565
    %v568 = vadd.f32 %v561, %v566
    %v569 = vadd.f32 %v568, %v418
    %v570 = vmax.f32 %v569, 0.0
    %v571 = vpack.c.bf16 %v570, %v570
    %v572 = vld [vmem:[#allocation24] sm:$0xf]
    %v573 = vld [vmem:[#allocation24 + $0x4] sm:$0xf]
    %v574 = vld [vmem:[#allocation24 + $0x8] sm:$0xf]
    %v575 = vld [vmem:[#allocation24 + $0xc] sm:$0xf]
    %v580 = vunpack.c.l.b16 %v572
    %v581 = vunpack.c.l.b16 %v573
    %v582 = vunpack.c.l.b16 %v574
    %v583 = vunpack.c.l.b16 %v575
    %v584 = vpack.c.b16 %v581, %v580
    %v585 = vpack.c.b16 %v583, %v582
    %v589 = vsel %vm380, %v571, 0
    %591 = vmatprep.subr.bf16.mxu0 0
    %592 = vmatpush1.bf16.msra.mxu0 %v584
    %593 = vmatprep.subr.bf16.mxu0 0
    %594 = vmatpush1.bf16.msra.mxu0 %v585
    %595 = vmatprep.subr.bf16.mxu0 0
    %596 = vmatpush1.bf16.msra.mxu0 0
    %597 = vmatprep.subr.bf16.mxu0 0
    %598 = vmatpush1.bf16.msra.mxu0 0
    %599 = vmatprep.subr.bf16.mxu0 0
    %600 = vmatpush1.bf16.msra.mxu0 0
    %601 = vmatprep.subr.bf16.mxu0 0
    %602 = vmatpush1.bf16.msra.mxu0 0
    %603 = vmatprep.subr.bf16.mxu0 0
    %604 = vmatpush1.bf16.msra.mxu0 0
    %605 = vmatprep.subr.bf16.mxu0 0
    %606 = vmatpush1.bf16.msra.mxu0 0
    %607 = vmatprep.subr.bf16.mxu0 0
    %608 = vmatpush1.bf16.msra.mxu0 0
    %609 = vmatprep.subr.bf16.mxu0 0
    %610 = vmatpush1.bf16.msra.mxu0 0
    %611 = vmatprep.subr.bf16.mxu0 0
    %612 = vmatpush1.bf16.msra.mxu0 0
    %613 = vmatprep.subr.bf16.mxu0 0
    %614 = vmatpush1.bf16.msra.mxu0 0
    %615 = vmatprep.subr.bf16.mxu0 0
    %616 = vmatpush1.bf16.msra.mxu0 0
    %617 = vmatprep.subr.bf16.mxu0 0
    %618 = vmatpush1.bf16.msra.mxu0 0
    %619 = vmatprep.subr.bf16.mxu0 0
    %620 = vmatpush1.bf16.msra.mxu0 0
    %621 = vmatprep.subr.bf16.mxu0 0
    %622 = vmatpush1.bf16.msra.mxu0 0
    %623 = vmatprep.mubr.bf16.mxu0 0
    %624 = vmatmul.mubr.bf16.gmra.mrb[0].mxu0 %v589
    %v625 = vpop.f32.mrb[0].mxu0
    %v626 = vadd.f32 0.0, %v625
    %v627 = vpop.f32.mrb[0].mxu0
    %v628 = vpop.f32.mrb[0].mxu0
    %v629 = vpop.f32.mrb[0].mxu0
    %630 = vdwg.mxu0
    %vm631 = vcmask 523264
    %632 = vst.msk [vmem:[#allocation2] sm:$0xff] %vm631, %v626
    %v633 = vld [vmem:[#allocation25] sm:$0xf]
    %v634 = vld [vmem:[#allocation25 + $0x4] sm:$0xf]
    %v635 = vld [vmem:[#allocation25 + $0x8] sm:$0xf]
    %v636 = vld [vmem:[#allocation25 + $0xc] sm:$0xf]
    %v641 = vunpack.c.l.b16 %v633
    %v642 = vunpack.c.l.b16 %v634
    %v643 = vunpack.c.l.b16 %v635
    %v644 = vunpack.c.l.b16 %v636
    %v645 = vpack.c.b16 %v642, %v641
    %v646 = vpack.c.b16 %v644, %v643
    %649 = vmatprep.subr.bf16.mxu0 0
    %650 = vmatpush1.bf16.msra.mxu0 %v645
    %651 = vmatprep.subr.bf16.mxu0 0
    %652 = vmatpush1.bf16.msra.mxu0 %v646
    %653 = vmatprep.subr.bf16.mxu0 0
    %654 = vmatpush1.bf16.msra.mxu0 0
    %655 = vmatprep.subr.bf16.mxu0 0
    %656 = vmatpush1.bf16.msra.mxu0 0
    %657 = vmatprep.subr.bf16.mxu0 0
    %658 = vmatpush1.bf16.msra.mxu0 0
    %659 = vmatprep.subr.bf16.mxu0 0
    %660 = vmatpush1.bf16.msra.mxu0 0
    %661 = vmatprep.subr.bf16.mxu0 0
    %662 = vmatpush1.bf16.msra.mxu0 0
    %663 = vmatprep.subr.bf16.mxu0 0
    %664 = vmatpush1.bf16.msra.mxu0 0
    %665 = vmatprep.subr.bf16.mxu0 0
    %666 = vmatpush1.bf16.msra.mxu0 0
    %667 = vmatprep.subr.bf16.mxu0 0
    %668 = vmatpush1.bf16.msra.mxu0 0
    %669 = vmatprep.subr.bf16.mxu0 0
    %670 = vmatpush1.bf16.msra.mxu0 0
    %671 = vmatprep.subr.bf16.mxu0 0
    %672 = vmatpush1.bf16.msra.mxu0 0
    %673 = vmatprep.subr.bf16.mxu0 0
    %674 = vmatpush1.bf16.msra.mxu0 0
    %675 = vmatprep.subr.bf16.mxu0 0
    %676 = vmatpush1.bf16.msra.mxu0 0
    %677 = vmatprep.subr.bf16.mxu0 0
    %678 = vmatpush1.bf16.msra.mxu0 0
    %679 = vmatprep.subr.bf16.mxu0 0
    %680 = vmatpush1.bf16.msra.mxu0 0
    %681 = vmatprep.mubr.bf16.mxu0 0
    %682 = vmatmul.mubr.bf16.gmra.mrb[0].mxu0 %v589
    %v683 = vpop.f32.mrb[0].mxu0
    %v684 = vadd.f32 0.0, %v683
    %v685 = vpop.f32.mrb[0].mxu0
    %v686 = vpop.f32.mrb[0].mxu0
    %v687 = vpop.f32.mrb[0].mxu0
    %688 = vdwg.mxu0
    %689 = vst.msk [vmem:[#allocation3] sm:$0xff] %vm631, %v684
    loop: start=0, step=1, limit=16
    $region150: #{tpu_custom_call.1} parent=1 // loop_pre_header
      _
    $region151: #{tpu_custom_call.1} parent=1 // loop_header
      %s691 = sphi 0, %s695
      %p692 = scmp.ge.s32.totalorder %s691, 16
    $region152: #{tpu_custom_call.1} parent=1 // loop_header_branch
      %694 = sbr.rel (%p692) target = $region156
    $region153: #{tpu_custom_call.1} parent=1 // loop_body
      %s696 = sld [smem:[#allocation6 + %s691]]
      %s697 = sshra.s32 %s691, 7
      %s698 = sand.u32 %s691, 127
      %s699 = sadd.s32 %s697, 1
      %s700 = smul.u32 %s699, 128
      %s701 = sshra.s32 %s691, 7
      %s702 = sand.u32 %s691, 127
      %s703 = sadd.s32 %s700, %s702
      %s704 = sld [smem:[#allocation6 + %s703]]
      %s705 = scalar_lea.vmem [#allocation2], %s696
      %v706 = vld [vmem:[%s705] sm:$0x1]
      %s707 = scalar_lea.vmem [#allocation3], %s704
      %v708 = vld [vmem:[%s707] sm:$0x1]
      %v709 = vadd.f32 %v706, %v708
      %s710 = scalar_lea.vmem [#allocation4], %s691
      %vm711 = vcmask 516096
      %712 = vst.msk [vmem:[%s710] sm:$0x1] %vm711, %v709
    $region154: #{tpu_custom_call.1} parent=1 // loop_footer
      %s695 = sadd.s32 1, %s691
    $region155: #{tpu_custom_call.1} parent=1 // loop_footer_branch
      %690 = sbr.rel target = $region151
    $region156: #{tpu_custom_call.1} parent=1 // loop_exit
      _
    %v713 = vld [vmem:[#allocation4] sm:$0xff]
    %v714 = vld [vmem:[#allocation4 + $0x8] sm:$0xff]
    %v715 = vld [vmem:[#allocation27] sm:$0x1]
    %v717 = vlaneseq
    %v718 = vshrl.u32 %v717, 7
    %v719 = vsub.s32 0, %v718
    %v720 = vrot.slane %v715, %v719
    %v722 = vadd.f32 %v713, %v720
    %v723 = vadd.f32 %v714, %v720
    %v724 = vld [vmem:[#allocation28] sm:$0x1]
    %v725 = vld [vmem:[#allocation30] sm:$0x1]
    %v726 = vsel %vm631, %v722, 0.0
    %v727 = vsel %vm631, %v723, 0.0
    %v728 = vadd.f32 %v726, %v727
    %v729 = vrot.slane %v728, 4
    %v730 = vadd.f32 %v728, %v729
    %v731 = vrot.slane %v730, 2
    %v732 = vadd.f32 %v730, %v731
    %v733 = vrot.slane %v732, 1
    %v734 = vadd.f32 %v732, %v733
    %v735 = vmul.f32 %v722, %v722
    %v736 = vmul.f32 %v723, %v723
    %v737 = vsel %vm631, %v735, 0.0
    %v738 = vsel %vm631, %v736, 0.0
    %v739 = vadd.f32 %v737, %v738
    %v740 = vrot.slane %v739, 4
    %v741 = vadd.f32 %v739, %v740
    %v742 = vrot.slane %v741, 2
    %v743 = vadd.f32 %v741, %v742
    %v744 = vrot.slane %v743, 1
    %v745 = vadd.f32 %v743, %v744
    %v746 = vmul.f32 %v734, 0.0625
    %v747 = vmul.f32 %v745, 0.0625
    %v748 = vmul.f32 %v746, %v746
    %v749 = vsub.f32 %v747, %v748
    %v750 = vsub.f32 %v722, %v746
    %v751 = vsub.f32 %v723, %v746
    %v752 = vadd.f32 %v749, 1e-05
    %v753 = vrsqrt.pop %v752
    %v754 = vmul.f32 %v750, %v753
    %v755 = vmul.f32 %v751, %v753
    %v757 = vlaneseq
    %v758 = vshrl.u32 %v757, 7
    %v759 = vsub.s32 0, %v758
    %v760 = vrot.slane %v724, %v759
    %v762 = vmul.f32 %v754, %v760
    %v763 = vmul.f32 %v755, %v760
    %v765 = vlaneseq
    %v766 = vshrl.u32 %v765, 7
    %v767 = vsub.s32 0, %v766
    %v768 = vrot.slane %v725, %v767
    %v770 = vadd.f32 %v762, %v768
    %v771 = vadd.f32 %v763, %v768
    %v772 = vmax.f32 %v770, 0.0
    %v773 = vmax.f32 %v771, 0.0
    %v774 = vpack.c.bf16 %v773, %v772
    %v775 = vld [vmem:[%s16] sm:$0xf]
    %v776 = vld [vmem:[%s16 + $0x4] sm:$0xf]
    %v777 = vld [vmem:[%s16 + $0x8] sm:$0xf]
    %v778 = vld [vmem:[%s16 + $0xc] sm:$0xf]
    %v779 = vld [vmem:[%s16 + $0x10] sm:$0xf]
    %v780 = vld [vmem:[%s16 + $0x14] sm:$0xf]
    %v781 = vld [vmem:[%s16 + $0x18] sm:$0xf]
    %v782 = vld [vmem:[%s16 + $0x1c] sm:$0xf]
    %v783 = vld [vmem:[#allocation31] sm:$0x1]
    %v785 = vlaneseq
    %v786 = vshrl.u32 %v785, 7
    %v787 = vsub.s32 0, %v786
    %v788 = vrot.slane %v783, %v787
    %v798 = vunpack.c.l.b16 %v775
    %v799 = vunpack.c.l.b16 %v776
    %v800 = vunpack.c.l.b16 %v777
    %v801 = vunpack.c.l.b16 %v778
    %v802 = vunpack.c.l.b16 %v779
    %v803 = vunpack.c.l.b16 %v780
    %v804 = vunpack.c.l.b16 %v781
    %v805 = vunpack.c.l.b16 %v782
    %v806 = vpack.c.b16 %v799, %v798
    %v807 = vpack.c.b16 %v801, %v800
    %v808 = vpack.c.b16 %v803, %v802
    %v809 = vpack.c.b16 %v805, %v804
    %v815 = vsel %vm631, %v774, 0
    %817 = vmatprep.subr.bf16.mxu0 0
    %818 = vmatpush1.bf16.msra.mxu0 %v806
    %819 = vmatprep.subr.bf16.mxu0 0
    %820 = vmatpush1.bf16.msra.mxu0 %v807
    %821 = vmatprep.subr.bf16.mxu0 0
    %822 = vmatpush1.bf16.msra.mxu0 %v808
    %823 = vmatprep.subr.bf16.mxu0 0
    %824 = vmatpush1.bf16.msra.mxu0 %v809
    %825 = vmatprep.subr.bf16.mxu0 0
    %826 = vmatpush1.bf16.msra.mxu0 0
    %827 = vmatprep.subr.bf16.mxu0 0
    %828 = vmatpush1.bf16.msra.mxu0 0
    %829 = vmatprep.subr.bf16.mxu0 0
    %830 = vmatpush1.bf16.msra.mxu0 0
    %831 = vmatprep.subr.bf16.mxu0 0
    %832 = vmatpush1.bf16.msra.mxu0 0
    %833 = vmatprep.subr.bf16.mxu0 0
    %834 = vmatpush1.bf16.msra.mxu0 0
    %835 = vmatprep.subr.bf16.mxu0 0
    %836 = vmatpush1.bf16.msra.mxu0 0
    %837 = vmatprep.subr.bf16.mxu0 0
    %838 = vmatpush1.bf16.msra.mxu0 0
    %839 = vmatprep.subr.bf16.mxu0 0
    %840 = vmatpush1.bf16.msra.mxu0 0
    %841 = vmatprep.subr.bf16.mxu0 0
    %842 = vmatpush1.bf16.msra.mxu0 0
    %843 = vmatprep.subr.bf16.mxu0 0
    %844 = vmatpush1.bf16.msra.mxu0 0
    %845 = vmatprep.subr.bf16.mxu0 0
    %846 = vmatpush1.bf16.msra.mxu0 0
    %847 = vmatprep.subr.bf16.mxu0 0
    %848 = vmatpush1.bf16.msra.mxu0 0
    %849 = vmatprep.mubr.bf16.mxu0 0
    %850 = vmatmul.mubr.bf16.gmra.mrb[0].mxu0 %v815
    %v851 = vpop.f32.mrb[0].mxu0
    %v852 = vadd.f32 %v788, %v851
    %v853 = vpop.f32.mrb[0].mxu0
    %v854 = vpop.f32.mrb[0].mxu0
    %v855 = vadd.f32 %v788, %v854
    %v856 = vpop.f32.mrb[0].mxu0
    %857 = vdwg.mxu0
    %v858 = vld [vmem:[%s18] sm:$0x1]
    %v859 = vld [vmem:[%s19] sm:$0x1]
    %v860 = vsel %vm631, %v852, 0.0
    %v861 = vsel %vm631, %v855, 0.0
    %v862 = vadd.f32 %v860, %v861
    %v863 = vrot.slane %v862, 4
    %v864 = vadd.f32 %v862, %v863
    %v865 = vrot.slane %v864, 2
    %v866 = vadd.f32 %v864, %v865
    %v867 = vrot.slane %v866, 1
    %v868 = vadd.f32 %v866, %v867
    %v869 = vmul.f32 %v852, %v852
    %v870 = vmul.f32 %v855, %v855
    %v871 = vsel %vm631, %v869, 0.0
    %v872 = vsel %vm631, %v870, 0.0
    %v873 = vadd.f32 %v871, %v872
    %v874 = vrot.slane %v873, 4
    %v875 = vadd.f32 %v873, %v874
    %v876 = vrot.slane %v875, 2
    %v877 = vadd.f32 %v875, %v876
    %v878 = vrot.slane %v877, 1
    %v879 = vadd.f32 %v877, %v878
    %v880 = vmul.f32 %v868, 0.0625
    %v881 = vmul.f32 %v879, 0.0625
    %v882 = vmul.f32 %v880, %v880
    %v883 = vsub.f32 %v881, %v882
    %v884 = vsub.f32 %v852, %v880
    %v885 = vsub.f32 %v855, %v880
    %v886 = vadd.f32 %v883, 1e-05
    %v887 = vrsqrt.pop %v886
    %v888 = vmul.f32 %v884, %v887
    %v889 = vmul.f32 %v885, %v887
    %v891 = vlaneseq
    %v892 = vshrl.u32 %v891, 7
    %v893 = vsub.s32 0, %v892
    %v894 = vrot.slane %v858, %v893
    %v896 = vmul.f32 %v888, %v894
    %v897 = vmul.f32 %v889, %v894
    %v899 = vlaneseq
    %v900 = vshrl.u32 %v899, 7
    %v901 = vsub.s32 0, %v900
    %v902 = vrot.slane %v859, %v901
    %v904 = vadd.f32 %v896, %v902
    %v905 = vadd.f32 %v897, %v902
    %v906 = vmax.f32 %v904, 0.0
    %v907 = vmax.f32 %v905, 0.0
    %v908 = vpack.c.bf16 %v907, %v906
    %v909 = vld [vmem:[%s20] sm:$0xf]
    %v910 = vld [vmem:[%s20 + $0x4] sm:$0xf]
    %v911 = vld [vmem:[%s20 + $0x8] sm:$0xf]
    %v912 = vld [vmem:[%s20 + $0xc] sm:$0xf]
    %v913 = vld [vmem:[%s20 + $0x10] sm:$0xf]
    %v914 = vld [vmem:[%s20 + $0x14] sm:$0xf]
    %v915 = vld [vmem:[%s20 + $0x18] sm:$0xf]
    %v916 = vld [vmem:[%s20 + $0x1c] sm:$0xf]
    %v917 = vld [vmem:[%s21] sm:$0x1]
    %v919 = vlaneseq
    %v920 = vshrl.u32 %v919, 7
    %v921 = vsub.s32 0, %v920
    %v922 = vrot.slane %v917, %v921
    %v932 = vunpack.c.l.b16 %v909
    %v933 = vunpack.c.l.b16 %v910
    %v934 = vunpack.c.l.b16 %v911
    %v935 = vunpack.c.l.b16 %v912
    %v936 = vunpack.c.l.b16 %v913
    %v937 = vunpack.c.l.b16 %v914
    %v938 = vunpack.c.l.b16 %v915
    %v939 = vunpack.c.l.b16 %v916
    %v940 = vpack.c.b16 %v933, %v932
    %v941 = vpack.c.b16 %v935, %v934
    %v942 = vpack.c.b16 %v937, %v936
    %v943 = vpack.c.b16 %v939, %v938
    %v949 = vsel %vm631, %v908, 0
    %951 = vmatprep.subr.bf16.mxu0 0
    %952 = vmatpush1.bf16.msra.mxu0 %v940
    %953 = vmatprep.subr.bf16.mxu0 0
    %954 = vmatpush1.bf16.msra.mxu0 %v941
    %955 = vmatprep.subr.bf16.mxu0 0
    %956 = vmatpush1.bf16.msra.mxu0 %v942
    %957 = vmatprep.subr.bf16.mxu0 0
    %958 = vmatpush1.bf16.msra.mxu0 %v943
    %959 = vmatprep.subr.bf16.mxu0 0
    %960 = vmatpush1.bf16.msra.mxu0 0
    %961 = vmatprep.subr.bf16.mxu0 0
    %962 = vmatpush1.bf16.msra.mxu0 0
    %963 = vmatprep.subr.bf16.mxu0 0
    %964 = vmatpush1.bf16.msra.mxu0 0
    %965 = vmatprep.subr.bf16.mxu0 0
    %966 = vmatpush1.bf16.msra.mxu0 0
    %967 = vmatprep.subr.bf16.mxu0 0
    %968 = vmatpush1.bf16.msra.mxu0 0
    %969 = vmatprep.subr.bf16.mxu0 0
    %970 = vmatpush1.bf16.msra.mxu0 0
    %971 = vmatprep.subr.bf16.mxu0 0
    %972 = vmatpush1.bf16.msra.mxu0 0
    %973 = vmatprep.subr.bf16.mxu0 0
    %974 = vmatpush1.bf16.msra.mxu0 0
    %975 = vmatprep.subr.bf16.mxu0 0
    %976 = vmatpush1.bf16.msra.mxu0 0
    %977 = vmatprep.subr.bf16.mxu0 0
    %978 = vmatpush1.bf16.msra.mxu0 0
    %979 = vmatprep.subr.bf16.mxu0 0
    %980 = vmatpush1.bf16.msra.mxu0 0
    %981 = vmatprep.subr.bf16.mxu0 0
    %982 = vmatpush1.bf16.msra.mxu0 0
    %983 = vmatprep.mubr.bf16.mxu0 0
    %984 = vmatmul.mubr.bf16.gmra.mrb[0].mxu0 %v949
    %v985 = vpop.f32.mrb[0].mxu0
    %v986 = vadd.f32 %v922, %v985
    %v987 = vpop.f32.mrb[0].mxu0
    %v988 = vpop.f32.mrb[0].mxu0
    %v989 = vadd.f32 %v922, %v988
    %v990 = vpop.f32.mrb[0].mxu0
    %991 = vdwg.mxu0
    %992 = vst [vmem:[#allocation33] sm:$0xff] %v986
    %993 = vst [vmem:[#allocation33 + $0x8] sm:$0xff] %v989
    // Predicated region
    $region157: #{tpu_custom_call.1} parent=1 // pred_check
      _
    $region158: #{tpu_custom_call.1} parent=1 // pred_check_branch
      %995 = sbr.rel (0) target = $region160
    $region159: #{tpu_custom_call.1} parent=1 // pred_region
      %s997 = ssub.s32 256, 256
      %998 = vsyncadd [#allocation9], %s997
      %s999 = sshll.u32 [#allocation33], 4
      %s1000 = int_to_ptr.vmem [resolvable:$true] %s999
      %1005 = dma.vmem_to_hbm [thread:$0]  %s1000, 256, %s22, [#allocation9], 128, 128, 8
    $region160: #{tpu_custom_call.1} parent=1 // pred_fallthru
      _
    // Predicated region
    $region161: #{tpu_custom_call.1} parent=1 // pred_check
      _
    $region162: #{tpu_custom_call.1} parent=1 // pred_check_branch
      %1007 = sbr.rel (0) target = $region164
    $region163: #{tpu_custom_call.1} parent=1 // pred_region
      %1008 = dma.done [#allocation9], 256
    $region164: #{tpu_custom_call.1} parent=1 // pred_fallthru
      _
    %1009 = vsyncpa [#allocation8], 1
    %1010 = vsyncpa [#allocation11], 1
    %1011 = vsyncpa [#allocation14], 1
    %1012 = vsyncpa [#allocation17], 1
    %1013 = vsyncpa [#allocation20], 1
    %1014 = vsyncpa [#allocation23], 1
    %1015 = vsyncpa [#allocation26], 1
    %1016 = vsyncpa [#allocation29], 1
    %1017 = vsyncpa [#allocation32], 1
    %1018 = vsyncpa [#allocation9], 1

</llo_original>
